<compile_context>
chip_gen: v7x
topology: tpu7x:2x2x1
jax: 0.10.0
libtpu: 0.0.40
codegen_flags: <defaults>
</compile_context>

<pallas_src>
import math

import jax
import jax.numpy as jnp
from jax import lax
from jax.experimental import pallas as pl
from jax.experimental.pallas import tpu as pltpu

# ----------------------- configuration (small, deterministic) -----------------
B = 8                      # batch
N_NUM = 8                  # n_num_features -> d_in = 8 (num_embeddings=None, no cats)
D_MAIN = 32                # d_main
D_MULT = 2.0               # d_multiplier
D_HIDDEN = int(D_MAIN * D_MULT)
NUM_HEADS = 2
D_HEAD = D_MAIN // NUM_HEADS
D_FFN = 2 * D_MAIN
PREDICTOR_N_BLOCKS = 1
CONTEXT_SIZE = 16          # context_size
BC = B * CONTEXT_SIZE      # flattened (batch, context) rows
N_CAND = 64                # number of candidates given at inference
D_OUT = 1                  # n_classes=None -> regression head

LN_EPS = 1e-5
NORM_EPS = 1e-12           # torch.nn.functional.normalize eps
_NEG = -3.0e38             # finite "minus infinity" for masked argmax


# ------------------------------ kernel helpers ---------------------------------
def _mm(a, b):
    """MXU matmul: bf16 operands, f32 accumulation (fewer MXU passes than f32)."""
    return jnp.dot(a.astype(jnp.bfloat16), b.astype(jnp.bfloat16),
                   preferred_element_type=jnp.float32)


def _layer_norm(x, gamma, beta):
    mu = jnp.mean(x, axis=-1, keepdims=True)
    var = jnp.mean((x - mu) * (x - mu), axis=-1, keepdims=True)
    return (x - mu) * lax.rsqrt(var + LN_EPS) * gamma + beta


# ------------------------------- fused kernel ----------------------------------
def make_fused_kernel(n_blocks):
    def kernel(*refs):
        f32 = jnp.float32
        x_ref, w01_ref, b01_ref, w1_ref, b1_ref, ck_ref, cy_ref = refs[:7]
        blk_refs = refs[7:7 + 16 * n_blocks]
        wh_ref, bh_ref, o_ref = refs[7 + 16 * n_blocks:]

        # ---- encoder_query (first two linears pre-composed) + F.normalize ----
        x = x_ref[...]                                                # (B, d_in)
        h = jnp.dot(x, w01_ref[...], preferred_element_type=f32) + b01_ref[...]
        h = jnp.maximum(h, 0.0)
        h = jnp.dot(h, w1_ref[...], preferred_element_type=f32) + b1_ref[...]
        # F.normalize(query, dim=1) == x / max(||x||, eps)
        qn = h * lax.rsqrt(jnp.maximum(jnp.sum(h * h, axis=-1, keepdims=True),
                                       NORM_EPS * NORM_EPS))          # (B, D)

        # ---- faiss IndexFlatIP scores, fused (no transposed copy of ck) ------
        ck = ck_ref[...]                                              # (N, D)
        scores = lax.dot_general(qn, ck, (((1,), (1,)), ((), ())),
                                 preferred_element_type=f32)          # (B, N)

        # ---- in-kernel top-C selection: C rounds of masked argmax ------------
        cand_iota = lax.broadcasted_iota(jnp.int32, (B, N_CAND), 1).astype(f32)
        avail = scores
        rank = jnp.full((B, N_CAND), float(CONTEXT_SIZE), f32)        # C == "not picked"
        for c in range(CONTEXT_SIZE):                                 # static unroll
            m = jnp.max(avail, axis=1, keepdims=True)                 # (B, 1)
            hit = jnp.where(avail == m, cand_iota, float(N_CAND))
            picked = jnp.min(hit, axis=1, keepdims=True)              # lowest-index tie-break
            onehot = cand_iota == picked                              # (B, N) exactly one True
            rank = jnp.where(onehot, float(c), rank)
            avail = jnp.where(onehot, _NEG, avail)
        # sel[b*C + c, n] = 1 iff candidate n was picked at slot c for batch b
        slot = lax.broadcasted_iota(
            jnp.int32, (B, CONTEXT_SIZE, N_CAND), 1).astype(f32)
        sel = (rank[:, None, :] == slot).astype(f32).reshape(BC, N_CAND)

        # block-diagonal per-head 0/1 matrix (same head iff floor(i/Dh)==floor(j/Dh))
        ri = lax.broadcasted_iota(jnp.int32, (D_MAIN, D_MAIN), 0).astype(f32)
        ci = lax.broadcasted_iota(jnp.int32, (D_MAIN, D_MAIN), 1).astype(f32)
        head_sum = (jnp.floor(ri * (1.0 / D_HEAD)) ==
                    jnp.floor(ci * (1.0 / D_HEAD))).astype(f32)       # (D, D)

        cy = cy_ref[...]                                              # (N, 1)
        q = qn                                                        # (B, D)
        for blk in range(n_blocks):                                   # static unroll
            (wq, bq, wk, bk, lvw, lvb, wo, bo,
             l1g, l1b, wf1, bf1, wf2, bf2, l2g, l2b) = [
                r[...] for r in blk_refs[16 * blk:16 * (blk + 1)]]

            # project the 64 candidate rows first, then one-hot gather; biases
            # and the rank-1 label encoder are folded into the candidate rows
            # (exact because every sel row sums to 1).
            cand_kp = _mm(ck, wk) + bk                                # (N, D)
            cand_v = cy * lvw + lvb                                   # (N, D), VPU only
            kp = _mm(sel, cand_kp)                                    # (BC, D)
            vp = _mm(sel, cand_v)                                     # (BC, D)

            # 1/sqrt(d_head) pre-folded into wq/bq.
            qp = _mm(q, wq) + bq                                      # (B, D)
            q_rep = jnp.broadcast_to(
                qp[:, None, :], (B, CONTEXT_SIZE, D_MAIN)).reshape(BC, D_MAIN)
            # per-(row, head) scores, replicated across the head's lanes
            s = _mm(q_rep * kp, head_sum)                             # (BC, D)

            # softmax over the C context rows with an exact per-(batch, head) max
            s3 = s.reshape(B, CONTEXT_SIZE, D_MAIN)
            smax = jnp.max(s3, axis=1, keepdims=True)                 # (B, 1, D)
            e3 = jnp.exp(s3 - smax)
            p3 = e3 / jnp.sum(e3, axis=1, keepdims=True)
            prob = p3.reshape(BC, D_MAIN)                             # (BC, D)

            ctx = jnp.sum((prob * vp).reshape(B, CONTEXT_SIZE, D_MAIN),
                          axis=1)                                     # (B, D)
            attn = _mm(ctx, wo) + bo

            x1 = _layer_norm(q + attn, l1g, l1b)
            ff = jnp.maximum(_mm(x1, wf1) + bf1, 0.0)
            ff = _mm(ff, wf2) + bf2
            q = _layer_norm(x1 + ff, l2g, l2b)

        # regression head Linear(d_main, 1)
        o_ref[...] = _mm(q, wh_ref[...]) + bh_ref[...]

    return kernel


# ------------------------------ pallas wrapper ----------------------------------
def _vmem():
    return pl.BlockSpec(memory_space=pltpu.MemorySpace.VMEM)


_BLOCK_KEYS = ("wq", "bq", "wk", "bk", "lv_w", "lv_b", "wo", "bo",
               "ln1_g", "ln1_b", "wf1", "bf1", "wf2", "bf2", "ln2_g", "ln2_b")


def pallas_forward(x_num, candidate_k, candidate_y2d, params):
    flat_blocks = []
    for blk in params["blocks"]:
        flat_blocks += [blk[k] for k in _BLOCK_KEYS]
    w01, b01, w1, b1 = params["encoder_query"]
    w_head, b_head = params["head"]
    args = (x_num, w01, b01, w1, b1, candidate_k, candidate_y2d,
            *flat_blocks, w_head, b_head)
    kernel = make_fused_kernel(len(params["blocks"]))
    return pl.pallas_call(
        kernel,
        in_specs=[_vmem() for _ in args],
        out_specs=_vmem(),
        out_shape=jax.ShapeDtypeStruct((B, D_OUT), jnp.float32),
    )(*args)


@jax.jit
def model_forward(x_num, candidate_k, candidate_y, params):
    # _encode: no num embeddings, no categorical features -> identity on x_num.
    # Single fused kernel does encoder, retrieval (top-C), attention and head.
    return pallas_forward(x_num, candidate_k, candidate_y.reshape(N_CAND, 1), params)


# ------------------------------ parameter init ----------------------------------
def _linear_params(key, d_in, d_out):
    kw, kb = jax.random.split(key)
    bound = 1.0 / math.sqrt(d_in)
    w = jax.random.uniform(kw, (d_in, d_out), jnp.float32, -bound, bound)
    b = jax.random.uniform(kb, (1, d_out), jnp.float32, -bound, bound)
    return w, b


def build_params(keys):
    bf16 = jnp.bfloat16
    # encoder_query: Linear(d_in,d_main) -> Linear(d_main,d_hidden) -> ReLU ->
    # Linear(d_hidden,d_main).  First two linears composed (exact identity).
    w_in, b_in = _linear_params(keys[0], N_NUM, D_MAIN)
    w0, b0 = _linear_params(keys[1], D_MAIN, D_HIDDEN)
    w1, b1 = _linear_params(keys[2], D_HIDDEN, D_MAIN)
    encoder = (w_in @ w0, b_in @ w0 + b0, w1, b1)

    # label_encoder = nn.Linear(1, d_main), reset_parameters -> U(-1/sqrt(2), 1/sqrt(2))
    lab_bound = 1.0 / math.sqrt(2.0)
    lab_w = jax.random.uniform(keys[3], (1, D_MAIN), jnp.float32, -lab_bound, lab_bound)
    lab_b = jax.random.uniform(keys[4], (1, D_MAIN), jnp.float32, -lab_bound, lab_bound)

    attn_scale = 1.0 / math.sqrt(D_HEAD)
    blocks = []
    for blk_key in jax.random.split(keys[5], PREDICTOR_N_BLOCKS):
        sub = jax.random.split(blk_key, 6)
        wq, bq = _linear_params(sub[0], D_MAIN, D_MAIN)
        wk, bk = _linear_params(sub[1], D_MAIN, D_MAIN)
        wv, bv = _linear_params(sub[2], D_MAIN, D_MAIN)
        wo, bo = _linear_params(sub[3], D_MAIN, D_MAIN)
        wf1, bf1 = _linear_params(sub[4], D_MAIN, D_FFN)
        wf2, bf2 = _linear_params(sub[5], D_FFN, D_MAIN)
        blocks.append(dict(
            # 1/sqrt(d_head) folded into the query projection (exact).
            wq=(wq * attn_scale).astype(bf16), bq=bq * attn_scale,
            wk=wk.astype(bf16), bk=bk,
            # rank-1 label encoder composed with W_v (exact).
            lv_w=lab_w @ wv, lv_b=lab_b @ wv + bv,
            wo=wo.astype(bf16), bo=bo,
            ln1_g=jnp.ones((1, D_MAIN), jnp.float32),
            ln1_b=jnp.zeros((1, D_MAIN), jnp.float32),
            wf1=wf1.astype(bf16), bf1=bf1,
            wf2=wf2.astype(bf16), bf2=bf2,
            ln2_g=jnp.ones((1, D_MAIN), jnp.float32),
            ln2_b=jnp.zeros((1, D_MAIN), jnp.float32),
        ))

    # head = nn.Linear(d_main, 1)
    w_head, b_head = _linear_params(keys[6], D_MAIN, D_OUT)
    return dict(encoder_query=encoder,
                blocks=blocks,
                head=(w_head.astype(bf16), b_head))


if __name__ == "__main__":
    root = jax.random.PRNGKey(0)
    keys = jax.random.split(root, 16)
    params = build_params(keys)

    # ---- inputs (inference: candidate_* are provided, already encoded & normalized) ----
    x_num = jax.random.normal(keys[7], (B, N_NUM), jnp.float32)
    ck = jax.random.normal(keys[8], (N_CAND, D_MAIN), jnp.float32)
    candidate_k = ck / jnp.linalg.norm(ck, axis=-1, keepdims=True)
    candidate_y = jax.random.normal(keys[9], (N_CAND,), jnp.float32)   # regression labels

    out = model_forward(x_num, candidate_k, candidate_y, params)
    jax.block_until_ready(out)
    assert out.shape == (B, D_OUT) and out.dtype == jnp.float32
    print("KERNEL_OK")
</pallas_src>

<mosaic_0001>
module attributes {stable_mosaic.version = 11 : i64} {
  func.func @kernel(%arg0: memref<8x8xf32, #tpu.memory_space<vmem>>, %arg1: memref<8x64xf32, #tpu.memory_space<vmem>>, %arg2: memref<1x64xf32, #tpu.memory_space<vmem>>, %arg3: memref<64x32xf32, #tpu.memory_space<vmem>>, %arg4: memref<1x32xf32, #tpu.memory_space<vmem>>, %arg5: memref<64x32xf32, #tpu.memory_space<vmem>>, %arg6: memref<64x1xf32, #tpu.memory_space<vmem>>, %arg7: memref<32x32xbf16, #tpu.memory_space<vmem>>, %arg8: memref<1x32xf32, #tpu.memory_space<vmem>>, %arg9: memref<32x32xbf16, #tpu.memory_space<vmem>>, %arg10: memref<1x32xf32, #tpu.memory_space<vmem>>, %arg11: memref<1x32xf32, #tpu.memory_space<vmem>>, %arg12: memref<1x32xf32, #tpu.memory_space<vmem>>, %arg13: memref<32x32xbf16, #tpu.memory_space<vmem>>, %arg14: memref<1x32xf32, #tpu.memory_space<vmem>>, %arg15: memref<1x32xf32, #tpu.memory_space<vmem>>, %arg16: memref<1x32xf32, #tpu.memory_space<vmem>>, %arg17: memref<32x64xbf16, #tpu.memory_space<vmem>>, %arg18: memref<1x64xf32, #tpu.memory_space<vmem>>, %arg19: memref<64x32xbf16, #tpu.memory_space<vmem>>, %arg20: memref<1x32xf32, #tpu.memory_space<vmem>>, %arg21: memref<1x32xf32, #tpu.memory_space<vmem>>, %arg22: memref<1x32xf32, #tpu.memory_space<vmem>>, %arg23: memref<32x1xbf16, #tpu.memory_space<vmem>>, %arg24: memref<1x1xf32, #tpu.memory_space<vmem>>, %arg25: memref<8x1xf32, #tpu.memory_space<vmem>>) attributes {dimension_semantics = [], scalar_prefetch = 0 : i64, scratch_operands = 0 : i64, tpu.core_type = #tpu.core_type<tc>} {
    %c0 = arith.constant 0 : index
    %c0_0 = arith.constant 0 : index
    %0 = vector.load %arg0[%c0, %c0_0] : memref<8x8xf32, #tpu.memory_space<vmem>>, vector<8x8xf32>
    %c0_1 = arith.constant 0 : index
    %c0_2 = arith.constant 0 : index
    %1 = vector.load %arg1[%c0_1, %c0_2] : memref<8x64xf32, #tpu.memory_space<vmem>>, vector<8x64xf32>
    %cst = arith.constant dense<0.000000e+00> : vector<8x64xf32>
    %2 = tpu.matmul %0, %1, %cst {dimension_numbers = #tpu.dot_dimension_numbers<[1], [0], [0], [1], [0, 0, 1, 1], [], []>} : vector<8x8xf32>, vector<8x64xf32>, vector<8x64xf32> -> vector<8x64xf32>
    %c0_3 = arith.constant 0 : index
    %c0_4 = arith.constant 0 : index
    %3 = vector.load %arg2[%c0_3, %c0_4] : memref<1x64xf32, #tpu.memory_space<vmem>>, vector<1x64xf32>
    %4 = vector.broadcast %3 : vector<1x64xf32> to vector<8x64xf32>
    %5 = arith.addf %2, %4 : vector<8x64xf32>
    %cst_5 = arith.constant 0.000000e+00 : f32
    %6 = vector.broadcast %cst_5 : f32 to vector<8x64xf32>
    %7 = arith.maximumf %5, %6 : vector<8x64xf32>
    %c0_6 = arith.constant 0 : index
    %c0_7 = arith.constant 0 : index
    %8 = vector.load %arg3[%c0_6, %c0_7] : memref<64x32xf32, #tpu.memory_space<vmem>>, vector<64x32xf32>
    %cst_8 = arith.constant dense<0.000000e+00> : vector<8x32xf32>
    %9 = tpu.matmul %7, %8, %cst_8 {dimension_numbers = #tpu.dot_dimension_numbers<[1], [0], [0], [1], [0, 0, 1, 1], [], []>} : vector<8x64xf32>, vector<64x32xf32>, vector<8x32xf32> -> vector<8x32xf32>
    %c0_9 = arith.constant 0 : index
    %c0_10 = arith.constant 0 : index
    %10 = vector.load %arg4[%c0_9, %c0_10] : memref<1x32xf32, #tpu.memory_space<vmem>>, vector<1x32xf32>
    %11 = vector.broadcast %10 : vector<1x32xf32> to vector<8x32xf32>
    %12 = arith.addf %9, %11 : vector<8x32xf32>
    %13 = arith.mulf %12, %12 : vector<8x32xf32>
    %cst_11 = arith.constant dense<0.000000e+00> : vector<8xf32>
    %14 = vector.multi_reduction <add>, %13, %cst_11 [1] : vector<8x32xf32> to vector<8xf32>
    %15 = vector.shape_cast %14 : vector<8xf32> to vector<8x1xf32>
    %cst_12 = arith.constant 1.000000e-24 : f32
    %16 = vector.broadcast %cst_12 : f32 to vector<8x1xf32>
    %17 = arith.maximumf %15, %16 : vector<8x1xf32>
    %18 = math.rsqrt %17 : vector<8x1xf32>
    %19 = vector.broadcast %18 : vector<8x1xf32> to vector<8x32xf32>
    %20 = arith.mulf %12, %19 : vector<8x32xf32>
    %c0_13 = arith.constant 0 : index
    %c0_14 = arith.constant 0 : index
    %21 = vector.load %arg5[%c0_13, %c0_14] : memref<64x32xf32, #tpu.memory_space<vmem>>, vector<64x32xf32>
    %cst_15 = arith.constant dense<0.000000e+00> : vector<8x64xf32>
    %22 = tpu.matmul %20, %21, %cst_15 {dimension_numbers = #tpu.dot_dimension_numbers<[1], [1], [0], [0], [0, 0, 1, 0], [], []>} : vector<8x32xf32>, vector<64x32xf32>, vector<8x64xf32> -> vector<8x64xf32>
    %23 = tpu.iota {dimensions = array<i32: 1>} : vector<8x64xi32>
    %24 = arith.sitofp %23 : vector<8x64xi32> to vector<8x64xf32>
    %cst_16 = arith.constant 1.600000e+01 : f32
    %25 = vector.broadcast %cst_16 : f32 to vector<8x64xf32>
    %cst_17 = arith.constant dense<0xFF800000> : vector<8xf32>
    %26 = vector.multi_reduction <maximumf>, %22, %cst_17 [1] : vector<8x64xf32> to vector<8xf32>
    %27 = vector.shape_cast %26 : vector<8xf32> to vector<8x1xf32>
    %28 = vector.broadcast %27 : vector<8x1xf32> to vector<8x64xf32>
    %29 = arith.cmpf oeq, %22, %28 : vector<8x64xf32>
    %cst_18 = arith.constant 6.400000e+01 : f32
    %30 = vector.broadcast %cst_18 : f32 to vector<8x64xf32>
    %31 = arith.select %29, %24, %30 : vector<8x64xi1>, vector<8x64xf32>
    %cst_19 = arith.constant dense<0x7F800000> : vector<8xf32>
    %32 = vector.multi_reduction <minimumf>, %31, %cst_19 [1] : vector<8x64xf32> to vector<8xf32>
    %33 = vector.shape_cast %32 : vector<8xf32> to vector<8x1xf32>
    %34 = vector.broadcast %33 : vector<8x1xf32> to vector<8x64xf32>
    %35 = arith.cmpf oeq, %24, %34 : vector<8x64xf32>
    %cst_20 = arith.constant 0.000000e+00 : f32
    %36 = vector.broadcast %cst_20 : f32 to vector<8x64xf32>
    %37 = arith.select %35, %36, %25 : vector<8x64xi1>, vector<8x64xf32>
    %cst_21 = arith.constant -3.000000e+38 : f32
    %38 = vector.broadcast %cst_21 : f32 to vector<8x64xf32>
    %39 = arith.select %35, %38, %22 : vector<8x64xi1>, vector<8x64xf32>
    %cst_22 = arith.constant dense<0xFF800000> : vector<8xf32>
    %40 = vector.multi_reduction <maximumf>, %39, %cst_22 [1] : vector<8x64xf32> to vector<8xf32>
    %41 = vector.shape_cast %40 : vector<8xf32> to vector<8x1xf32>
    %42 = vector.broadcast %41 : vector<8x1xf32> to vector<8x64xf32>
    %43 = arith.cmpf oeq, %39, %42 : vector<8x64xf32>
    %cst_23 = arith.constant 6.400000e+01 : f32
    %44 = vector.broadcast %cst_23 : f32 to vector<8x64xf32>
    %45 = arith.select %43, %24, %44 : vector<8x64xi1>, vector<8x64xf32>
    %cst_24 = arith.constant dense<0x7F800000> : vector<8xf32>
    %46 = vector.multi_reduction <minimumf>, %45, %cst_24 [1] : vector<8x64xf32> to vector<8xf32>
    %47 = vector.shape_cast %46 : vector<8xf32> to vector<8x1xf32>
    %48 = vector.broadcast %47 : vector<8x1xf32> to vector<8x64xf32>
    %49 = arith.cmpf oeq, %24, %48 : vector<8x64xf32>
    %cst_25 = arith.constant 1.000000e+00 : f32
    %50 = vector.broadcast %cst_25 : f32 to vector<8x64xf32>
    %51 = arith.select %49, %50, %37 : vector<8x64xi1>, vector<8x64xf32>
    %cst_26 = arith.constant -3.000000e+38 : f32
    %52 = vector.broadcast %cst_26 : f32 to vector<8x64xf32>
    %53 = arith.select %49, %52, %39 : vector<8x64xi1>, vector<8x64xf32>
    %cst_27 = arith.constant dense<0xFF800000> : vector<8xf32>
    %54 = vector.multi_reduction <maximumf>, %53, %cst_27 [1] : vector<8x64xf32> to vector<8xf32>
    %55 = vector.shape_cast %54 : vector<8xf32> to vector<8x1xf32>
    %56 = vector.broadcast %55 : vector<8x1xf32> to vector<8x64xf32>
    %57 = arith.cmpf oeq, %53, %56 : vector<8x64xf32>
    %cst_28 = arith.constant 6.400000e+01 : f32
    %58 = vector.broadcast %cst_28 : f32 to vector<8x64xf32>
    %59 = arith.select %57, %24, %58 : vector<8x64xi1>, vector<8x64xf32>
    %cst_29 = arith.constant dense<0x7F800000> : vector<8xf32>
    %60 = vector.multi_reduction <minimumf>, %59, %cst_29 [1] : vector<8x64xf32> to vector<8xf32>
    %61 = vector.shape_cast %60 : vector<8xf32> to vector<8x1xf32>
    %62 = vector.broadcast %61 : vector<8x1xf32> to vector<8x64xf32>
    %63 = arith.cmpf oeq, %24, %62 : vector<8x64xf32>
    %cst_30 = arith.constant 2.000000e+00 : f32
    %64 = vector.broadcast %cst_30 : f32 to vector<8x64xf32>
    %65 = arith.select %63, %64, %51 : vector<8x64xi1>, vector<8x64xf32>
    %cst_31 = arith.constant -3.000000e+38 : f32
    %66 = vector.broadcast %cst_31 : f32 to vector<8x64xf32>
    %67 = arith.select %63, %66, %53 : vector<8x64xi1>, vector<8x64xf32>
    %cst_32 = arith.constant dense<0xFF800000> : vector<8xf32>
    %68 = vector.multi_reduction <maximumf>, %67, %cst_32 [1] : vector<8x64xf32> to vector<8xf32>
    %69 = vector.shape_cast %68 : vector<8xf32> to vector<8x1xf32>
    %70 = vector.broadcast %69 : vector<8x1xf32> to vector<8x64xf32>
    %71 = arith.cmpf oeq, %67, %70 : vector<8x64xf32>
    %cst_33 = arith.constant 6.400000e+01 : f32
    %72 = vector.broadcast %cst_33 : f32 to vector<8x64xf32>
    %73 = arith.select %71, %24, %72 : vector<8x64xi1>, vector<8x64xf32>
    %cst_34 = arith.constant dense<0x7F800000> : vector<8xf32>
    %74 = vector.multi_reduction <minimumf>, %73, %cst_34 [1] : vector<8x64xf32> to vector<8xf32>
    %75 = vector.shape_cast %74 : vector<8xf32> to vector<8x1xf32>
    %76 = vector.broadcast %75 : vector<8x1xf32> to vector<8x64xf32>
    %77 = arith.cmpf oeq, %24, %76 : vector<8x64xf32>
    %cst_35 = arith.constant 3.000000e+00 : f32
    %78 = vector.broadcast %cst_35 : f32 to vector<8x64xf32>
    %79 = arith.select %77, %78, %65 : vector<8x64xi1>, vector<8x64xf32>
    %cst_36 = arith.constant -3.000000e+38 : f32
    %80 = vector.broadcast %cst_36 : f32 to vector<8x64xf32>
    %81 = arith.select %77, %80, %67 : vector<8x64xi1>, vector<8x64xf32>
    %cst_37 = arith.constant dense<0xFF800000> : vector<8xf32>
    %82 = vector.multi_reduction <maximumf>, %81, %cst_37 [1] : vector<8x64xf32> to vector<8xf32>
    %83 = vector.shape_cast %82 : vector<8xf32> to vector<8x1xf32>
    %84 = vector.broadcast %83 : vector<8x1xf32> to vector<8x64xf32>
    %85 = arith.cmpf oeq, %81, %84 : vector<8x64xf32>
    %cst_38 = arith.constant 6.400000e+01 : f32
    %86 = vector.broadcast %cst_38 : f32 to vector<8x64xf32>
    %87 = arith.select %85, %24, %86 : vector<8x64xi1>, vector<8x64xf32>
    %cst_39 = arith.constant dense<0x7F800000> : vector<8xf32>
    %88 = vector.multi_reduction <minimumf>, %87, %cst_39 [1] : vector<8x64xf32> to vector<8xf32>
    %89 = vector.shape_cast %88 : vector<8xf32> to vector<8x1xf32>
    %90 = vector.broadcast %89 : vector<8x1xf32> to vector<8x64xf32>
    %91 = arith.cmpf oeq, %24, %90 : vector<8x64xf32>
    %cst_40 = arith.constant 4.000000e+00 : f32
    %92 = vector.broadcast %cst_40 : f32 to vector<8x64xf32>
    %93 = arith.select %91, %92, %79 : vector<8x64xi1>, vector<8x64xf32>
    %cst_41 = arith.constant -3.000000e+38 : f32
    %94 = vector.broadcast %cst_41 : f32 to vector<8x64xf32>
    %95 = arith.select %91, %94, %81 : vector<8x64xi1>, vector<8x64xf32>
    %cst_42 = arith.constant dense<0xFF800000> : vector<8xf32>
    %96 = vector.multi_reduction <maximumf>, %95, %cst_42 [1] : vector<8x64xf32> to vector<8xf32>
    %97 = vector.shape_cast %96 : vector<8xf32> to vector<8x1xf32>
    %98 = vector.broadcast %97 : vector<8x1xf32> to vector<8x64xf32>
    %99 = arith.cmpf oeq, %95, %98 : vector<8x64xf32>
    %cst_43 = arith.constant 6.400000e+01 : f32
    %100 = vector.broadcast %cst_43 : f32 to vector<8x64xf32>
    %101 = arith.select %99, %24, %100 : vector<8x64xi1>, vector<8x64xf32>
    %cst_44 = arith.constant dense<0x7F800000> : vector<8xf32>
    %102 = vector.multi_reduction <minimumf>, %101, %cst_44 [1] : vector<8x64xf32> to vector<8xf32>
    %103 = vector.shape_cast %102 : vector<8xf32> to vector<8x1xf32>
    %104 = vector.broadcast %103 : vector<8x1xf32> to vector<8x64xf32>
    %105 = arith.cmpf oeq, %24, %104 : vector<8x64xf32>
    %cst_45 = arith.constant 5.000000e+00 : f32
    %106 = vector.broadcast %cst_45 : f32 to vector<8x64xf32>
    %107 = arith.select %105, %106, %93 : vector<8x64xi1>, vector<8x64xf32>
    %cst_46 = arith.constant -3.000000e+38 : f32
    %108 = vector.broadcast %cst_46 : f32 to vector<8x64xf32>
    %109 = arith.select %105, %108, %95 : vector<8x64xi1>, vector<8x64xf32>
    %cst_47 = arith.constant dense<0xFF800000> : vector<8xf32>
    %110 = vector.multi_reduction <maximumf>, %109, %cst_47 [1] : vector<8x64xf32> to vector<8xf32>
    %111 = vector.shape_cast %110 : vector<8xf32> to vector<8x1xf32>
    %112 = vector.broadcast %111 : vector<8x1xf32> to vector<8x64xf32>
    %113 = arith.cmpf oeq, %109, %112 : vector<8x64xf32>
    %cst_48 = arith.constant 6.400000e+01 : f32
    %114 = vector.broadcast %cst_48 : f32 to vector<8x64xf32>
    %115 = arith.select %113, %24, %114 : vector<8x64xi1>, vector<8x64xf32>
    %cst_49 = arith.constant dense<0x7F800000> : vector<8xf32>
    %116 = vector.multi_reduction <minimumf>, %115, %cst_49 [1] : vector<8x64xf32> to vector<8xf32>
    %117 = vector.shape_cast %116 : vector<8xf32> to vector<8x1xf32>
    %118 = vector.broadcast %117 : vector<8x1xf32> to vector<8x64xf32>
    %119 = arith.cmpf oeq, %24, %118 : vector<8x64xf32>
    %cst_50 = arith.constant 6.000000e+00 : f32
    %120 = vector.broadcast %cst_50 : f32 to vector<8x64xf32>
    %121 = arith.select %119, %120, %107 : vector<8x64xi1>, vector<8x64xf32>
    %cst_51 = arith.constant -3.000000e+38 : f32
    %122 = vector.broadcast %cst_51 : f32 to vector<8x64xf32>
    %123 = arith.select %119, %122, %109 : vector<8x64xi1>, vector<8x64xf32>
    %cst_52 = arith.constant dense<0xFF800000> : vector<8xf32>
    %124 = vector.multi_reduction <maximumf>, %123, %cst_52 [1] : vector<8x64xf32> to vector<8xf32>
    %125 = vector.shape_cast %124 : vector<8xf32> to vector<8x1xf32>
    %126 = vector.broadcast %125 : vector<8x1xf32> to vector<8x64xf32>
    %127 = arith.cmpf oeq, %123, %126 : vector<8x64xf32>
    %cst_53 = arith.constant 6.400000e+01 : f32
    %128 = vector.broadcast %cst_53 : f32 to vector<8x64xf32>
    %129 = arith.select %127, %24, %128 : vector<8x64xi1>, vector<8x64xf32>
    %cst_54 = arith.constant dense<0x7F800000> : vector<8xf32>
    %130 = vector.multi_reduction <minimumf>, %129, %cst_54 [1] : vector<8x64xf32> to vector<8xf32>
    %131 = vector.shape_cast %130 : vector<8xf32> to vector<8x1xf32>
    %132 = vector.broadcast %131 : vector<8x1xf32> to vector<8x64xf32>
    %133 = arith.cmpf oeq, %24, %132 : vector<8x64xf32>
    %cst_55 = arith.constant 7.000000e+00 : f32
    %134 = vector.broadcast %cst_55 : f32 to vector<8x64xf32>
    %135 = arith.select %133, %134, %121 : vector<8x64xi1>, vector<8x64xf32>
    %cst_56 = arith.constant -3.000000e+38 : f32
    %136 = vector.broadcast %cst_56 : f32 to vector<8x64xf32>
    %137 = arith.select %133, %136, %123 : vector<8x64xi1>, vector<8x64xf32>
    %cst_57 = arith.constant dense<0xFF800000> : vector<8xf32>
    %138 = vector.multi_reduction <maximumf>, %137, %cst_57 [1] : vector<8x64xf32> to vector<8xf32>
    %139 = vector.shape_cast %138 : vector<8xf32> to vector<8x1xf32>
    %140 = vector.broadcast %139 : vector<8x1xf32> to vector<8x64xf32>
    %141 = arith.cmpf oeq, %137, %140 : vector<8x64xf32>
    %cst_58 = arith.constant 6.400000e+01 : f32
    %142 = vector.broadcast %cst_58 : f32 to vector<8x64xf32>
    %143 = arith.select %141, %24, %142 : vector<8x64xi1>, vector<8x64xf32>
    %cst_59 = arith.constant dense<0x7F800000> : vector<8xf32>
    %144 = vector.multi_reduction <minimumf>, %143, %cst_59 [1] : vector<8x64xf32> to vector<8xf32>
    %145 = vector.shape_cast %144 : vector<8xf32> to vector<8x1xf32>
    %146 = vector.broadcast %145 : vector<8x1xf32> to vector<8x64xf32>
    %147 = arith.cmpf oeq, %24, %146 : vector<8x64xf32>
    %cst_60 = arith.constant 8.000000e+00 : f32
    %148 = vector.broadcast %cst_60 : f32 to vector<8x64xf32>
    %149 = arith.select %147, %148, %135 : vector<8x64xi1>, vector<8x64xf32>
    %cst_61 = arith.constant -3.000000e+38 : f32
    %150 = vector.broadcast %cst_61 : f32 to vector<8x64xf32>
    %151 = arith.select %147, %150, %137 : vector<8x64xi1>, vector<8x64xf32>
    %cst_62 = arith.constant dense<0xFF800000> : vector<8xf32>
    %152 = vector.multi_reduction <maximumf>, %151, %cst_62 [1] : vector<8x64xf32> to vector<8xf32>
    %153 = vector.shape_cast %152 : vector<8xf32> to vector<8x1xf32>
    %154 = vector.broadcast %153 : vector<8x1xf32> to vector<8x64xf32>
    %155 = arith.cmpf oeq, %151, %154 : vector<8x64xf32>
    %cst_63 = arith.constant 6.400000e+01 : f32
    %156 = vector.broadcast %cst_63 : f32 to vector<8x64xf32>
    %157 = arith.select %155, %24, %156 : vector<8x64xi1>, vector<8x64xf32>
    %cst_64 = arith.constant dense<0x7F800000> : vector<8xf32>
    %158 = vector.multi_reduction <minimumf>, %157, %cst_64 [1] : vector<8x64xf32> to vector<8xf32>
    %159 = vector.shape_cast %158 : vector<8xf32> to vector<8x1xf32>
    %160 = vector.broadcast %159 : vector<8x1xf32> to vector<8x64xf32>
    %161 = arith.cmpf oeq, %24, %160 : vector<8x64xf32>
    %cst_65 = arith.constant 9.000000e+00 : f32
    %162 = vector.broadcast %cst_65 : f32 to vector<8x64xf32>
    %163 = arith.select %161, %162, %149 : vector<8x64xi1>, vector<8x64xf32>
    %cst_66 = arith.constant -3.000000e+38 : f32
    %164 = vector.broadcast %cst_66 : f32 to vector<8x64xf32>
    %165 = arith.select %161, %164, %151 : vector<8x64xi1>, vector<8x64xf32>
    %cst_67 = arith.constant dense<0xFF800000> : vector<8xf32>
    %166 = vector.multi_reduction <maximumf>, %165, %cst_67 [1] : vector<8x64xf32> to vector<8xf32>
    %167 = vector.shape_cast %166 : vector<8xf32> to vector<8x1xf32>
    %168 = vector.broadcast %167 : vector<8x1xf32> to vector<8x64xf32>
    %169 = arith.cmpf oeq, %165, %168 : vector<8x64xf32>
    %cst_68 = arith.constant 6.400000e+01 : f32
    %170 = vector.broadcast %cst_68 : f32 to vector<8x64xf32>
    %171 = arith.select %169, %24, %170 : vector<8x64xi1>, vector<8x64xf32>
    %cst_69 = arith.constant dense<0x7F800000> : vector<8xf32>
    %172 = vector.multi_reduction <minimumf>, %171, %cst_69 [1] : vector<8x64xf32> to vector<8xf32>
    %173 = vector.shape_cast %172 : vector<8xf32> to vector<8x1xf32>
    %174 = vector.broadcast %173 : vector<8x1xf32> to vector<8x64xf32>
    %175 = arith.cmpf oeq, %24, %174 : vector<8x64xf32>
    %cst_70 = arith.constant 1.000000e+01 : f32
    %176 = vector.broadcast %cst_70 : f32 to vector<8x64xf32>
    %177 = arith.select %175, %176, %163 : vector<8x64xi1>, vector<8x64xf32>
    %cst_71 = arith.constant -3.000000e+38 : f32
    %178 = vector.broadcast %cst_71 : f32 to vector<8x64xf32>
    %179 = arith.select %175, %178, %165 : vector<8x64xi1>, vector<8x64xf32>
    %cst_72 = arith.constant dense<0xFF800000> : vector<8xf32>
    %180 = vector.multi_reduction <maximumf>, %179, %cst_72 [1] : vector<8x64xf32> to vector<8xf32>
    %181 = vector.shape_cast %180 : vector<8xf32> to vector<8x1xf32>
    %182 = vector.broadcast %181 : vector<8x1xf32> to vector<8x64xf32>
    %183 = arith.cmpf oeq, %179, %182 : vector<8x64xf32>
    %cst_73 = arith.constant 6.400000e+01 : f32
    %184 = vector.broadcast %cst_73 : f32 to vector<8x64xf32>
    %185 = arith.select %183, %24, %184 : vector<8x64xi1>, vector<8x64xf32>
    %cst_74 = arith.constant dense<0x7F800000> : vector<8xf32>
    %186 = vector.multi_reduction <minimumf>, %185, %cst_74 [1] : vector<8x64xf32> to vector<8xf32>
    %187 = vector.shape_cast %186 : vector<8xf32> to vector<8x1xf32>
    %188 = vector.broadcast %187 : vector<8x1xf32> to vector<8x64xf32>
    %189 = arith.cmpf oeq, %24, %188 : vector<8x64xf32>
    %cst_75 = arith.constant 1.100000e+01 : f32
    %190 = vector.broadcast %cst_75 : f32 to vector<8x64xf32>
    %191 = arith.select %189, %190, %177 : vector<8x64xi1>, vector<8x64xf32>
    %cst_76 = arith.constant -3.000000e+38 : f32
    %192 = vector.broadcast %cst_76 : f32 to vector<8x64xf32>
    %193 = arith.select %189, %192, %179 : vector<8x64xi1>, vector<8x64xf32>
    %cst_77 = arith.constant dense<0xFF800000> : vector<8xf32>
    %194 = vector.multi_reduction <maximumf>, %193, %cst_77 [1] : vector<8x64xf32> to vector<8xf32>
    %195 = vector.shape_cast %194 : vector<8xf32> to vector<8x1xf32>
    %196 = vector.broadcast %195 : vector<8x1xf32> to vector<8x64xf32>
    %197 = arith.cmpf oeq, %193, %196 : vector<8x64xf32>
    %cst_78 = arith.constant 6.400000e+01 : f32
    %198 = vector.broadcast %cst_78 : f32 to vector<8x64xf32>
    %199 = arith.select %197, %24, %198 : vector<8x64xi1>, vector<8x64xf32>
    %cst_79 = arith.constant dense<0x7F800000> : vector<8xf32>
    %200 = vector.multi_reduction <minimumf>, %199, %cst_79 [1] : vector<8x64xf32> to vector<8xf32>
    %201 = vector.shape_cast %200 : vector<8xf32> to vector<8x1xf32>
    %202 = vector.broadcast %201 : vector<8x1xf32> to vector<8x64xf32>
    %203 = arith.cmpf oeq, %24, %202 : vector<8x64xf32>
    %cst_80 = arith.constant 1.200000e+01 : f32
    %204 = vector.broadcast %cst_80 : f32 to vector<8x64xf32>
    %205 = arith.select %203, %204, %191 : vector<8x64xi1>, vector<8x64xf32>
    %cst_81 = arith.constant -3.000000e+38 : f32
    %206 = vector.broadcast %cst_81 : f32 to vector<8x64xf32>
    %207 = arith.select %203, %206, %193 : vector<8x64xi1>, vector<8x64xf32>
    %cst_82 = arith.constant dense<0xFF800000> : vector<8xf32>
    %208 = vector.multi_reduction <maximumf>, %207, %cst_82 [1] : vector<8x64xf32> to vector<8xf32>
    %209 = vector.shape_cast %208 : vector<8xf32> to vector<8x1xf32>
    %210 = vector.broadcast %209 : vector<8x1xf32> to vector<8x64xf32>
    %211 = arith.cmpf oeq, %207, %210 : vector<8x64xf32>
    %cst_83 = arith.constant 6.400000e+01 : f32
    %212 = vector.broadcast %cst_83 : f32 to vector<8x64xf32>
    %213 = arith.select %211, %24, %212 : vector<8x64xi1>, vector<8x64xf32>
    %cst_84 = arith.constant dense<0x7F800000> : vector<8xf32>
    %214 = vector.multi_reduction <minimumf>, %213, %cst_84 [1] : vector<8x64xf32> to vector<8xf32>
    %215 = vector.shape_cast %214 : vector<8xf32> to vector<8x1xf32>
    %216 = vector.broadcast %215 : vector<8x1xf32> to vector<8x64xf32>
    %217 = arith.cmpf oeq, %24, %216 : vector<8x64xf32>
    %cst_85 = arith.constant 1.300000e+01 : f32
    %218 = vector.broadcast %cst_85 : f32 to vector<8x64xf32>
    %219 = arith.select %217, %218, %205 : vector<8x64xi1>, vector<8x64xf32>
    %cst_86 = arith.constant -3.000000e+38 : f32
    %220 = vector.broadcast %cst_86 : f32 to vector<8x64xf32>
    %221 = arith.select %217, %220, %207 : vector<8x64xi1>, vector<8x64xf32>
    %cst_87 = arith.constant dense<0xFF800000> : vector<8xf32>
    %222 = vector.multi_reduction <maximumf>, %221, %cst_87 [1] : vector<8x64xf32> to vector<8xf32>
    %223 = vector.shape_cast %222 : vector<8xf32> to vector<8x1xf32>
    %224 = vector.broadcast %223 : vector<8x1xf32> to vector<8x64xf32>
    %225 = arith.cmpf oeq, %221, %224 : vector<8x64xf32>
    %cst_88 = arith.constant 6.400000e+01 : f32
    %226 = vector.broadcast %cst_88 : f32 to vector<8x64xf32>
    %227 = arith.select %225, %24, %226 : vector<8x64xi1>, vector<8x64xf32>
    %cst_89 = arith.constant dense<0x7F800000> : vector<8xf32>
    %228 = vector.multi_reduction <minimumf>, %227, %cst_89 [1] : vector<8x64xf32> to vector<8xf32>
    %229 = vector.shape_cast %228 : vector<8xf32> to vector<8x1xf32>
    %230 = vector.broadcast %229 : vector<8x1xf32> to vector<8x64xf32>
    %231 = arith.cmpf oeq, %24, %230 : vector<8x64xf32>
    %cst_90 = arith.constant 1.400000e+01 : f32
    %232 = vector.broadcast %cst_90 : f32 to vector<8x64xf32>
    %233 = arith.select %231, %232, %219 : vector<8x64xi1>, vector<8x64xf32>
    %cst_91 = arith.constant -3.000000e+38 : f32
    %234 = vector.broadcast %cst_91 : f32 to vector<8x64xf32>
    %235 = arith.select %231, %234, %221 : vector<8x64xi1>, vector<8x64xf32>
    %cst_92 = arith.constant dense<0xFF800000> : vector<8xf32>
    %236 = vector.multi_reduction <maximumf>, %235, %cst_92 [1] : vector<8x64xf32> to vector<8xf32>
    %237 = vector.shape_cast %236 : vector<8xf32> to vector<8x1xf32>
    %238 = vector.broadcast %237 : vector<8x1xf32> to vector<8x64xf32>
    %239 = arith.cmpf oeq, %235, %238 : vector<8x64xf32>
    %cst_93 = arith.constant 6.400000e+01 : f32
    %240 = vector.broadcast %cst_93 : f32 to vector<8x64xf32>
    %241 = arith.select %239, %24, %240 : vector<8x64xi1>, vector<8x64xf32>
    %cst_94 = arith.constant dense<0x7F800000> : vector<8xf32>
    %242 = vector.multi_reduction <minimumf>, %241, %cst_94 [1] : vector<8x64xf32> to vector<8xf32>
    %243 = vector.shape_cast %242 : vector<8xf32> to vector<8x1xf32>
    %244 = vector.broadcast %243 : vector<8x1xf32> to vector<8x64xf32>
    %245 = arith.cmpf oeq, %24, %244 : vector<8x64xf32>
    %cst_95 = arith.constant 1.500000e+01 : f32
    %246 = vector.broadcast %cst_95 : f32 to vector<8x64xf32>
    %247 = arith.select %245, %246, %233 : vector<8x64xi1>, vector<8x64xf32>
    %248 = tpu.iota {dimensions = array<i32: 1>} : vector<8x16x64xi32>
    %249 = arith.sitofp %248 : vector<8x16x64xi32> to vector<8x16x64xf32>
    %250 = vector.shape_cast %247 : vector<8x64xf32> to vector<8x1x64xf32>
    %251 = vector.broadcast %250 : vector<8x1x64xf32> to vector<8x16x64xf32>
    %252 = arith.cmpf oeq, %251, %249 : vector<8x16x64xf32>
    %253 = arith.extui %252 : vector<8x16x64xi1> to vector<8x16x64xi32>
    %254 = arith.sitofp %253 : vector<8x16x64xi32> to vector<8x16x64xf32>
    %255 = vector.shape_cast %254 : vector<8x16x64xf32> to vector<128x64xf32>
    %256 = tpu.iota {dimensions = array<i32: 0>} : vector<32x32xi32>
    %257 = arith.sitofp %256 : vector<32x32xi32> to vector<32x32xf32>
    %258 = tpu.iota {dimensions = array<i32: 1>} : vector<32x32xi32>
    %259 = arith.sitofp %258 : vector<32x32xi32> to vector<32x32xf32>
    %cst_96 = arith.constant 6.250000e-02 : f32
    %260 = vector.broadcast %cst_96 : f32 to vector<32x32xf32>
    %261 = arith.mulf %257, %260 : vector<32x32xf32>
    %262 = math.floor %261 : vector<32x32xf32>
    %cst_97 = arith.constant 6.250000e-02 : f32
    %263 = vector.broadcast %cst_97 : f32 to vector<32x32xf32>
    %264 = arith.mulf %259, %263 : vector<32x32xf32>
    %265 = math.floor %264 : vector<32x32xf32>
    %266 = arith.cmpf oeq, %262, %265 : vector<32x32xf32>
    %267 = arith.extui %266 : vector<32x32xi1> to vector<32x32xi32>
    %268 = arith.sitofp %267 : vector<32x32xi32> to vector<32x32xf32>
    %c0_98 = arith.constant 0 : index
    %c0_99 = arith.constant 0 : index
    %269 = vector.load %arg6[%c0_98, %c0_99] : memref<64x1xf32, #tpu.memory_space<vmem>>, vector<64x1xf32>
    %c0_100 = arith.constant 0 : index
    %c0_101 = arith.constant 0 : index
    %270 = vector.load %arg7[%c0_100, %c0_101] : memref<32x32xbf16, #tpu.memory_space<vmem>>, vector<32x32xbf16>
    %c0_102 = arith.constant 0 : index
    %c0_103 = arith.constant 0 : index
    %271 = vector.load %arg8[%c0_102, %c0_103] : memref<1x32xf32, #tpu.memory_space<vmem>>, vector<1x32xf32>
    %c0_104 = arith.constant 0 : index
    %c0_105 = arith.constant 0 : index
    %272 = vector.load %arg9[%c0_104, %c0_105] : memref<32x32xbf16, #tpu.memory_space<vmem>>, vector<32x32xbf16>
    %c0_106 = arith.constant 0 : index
    %c0_107 = arith.constant 0 : index
    %273 = vector.load %arg10[%c0_106, %c0_107] : memref<1x32xf32, #tpu.memory_space<vmem>>, vector<1x32xf32>
    %c0_108 = arith.constant 0 : index
    %c0_109 = arith.constant 0 : index
    %274 = vector.load %arg11[%c0_108, %c0_109] : memref<1x32xf32, #tpu.memory_space<vmem>>, vector<1x32xf32>
    %c0_110 = arith.constant 0 : index
    %c0_111 = arith.constant 0 : index
    %275 = vector.load %arg12[%c0_110, %c0_111] : memref<1x32xf32, #tpu.memory_space<vmem>>, vector<1x32xf32>
    %c0_112 = arith.constant 0 : index
    %c0_113 = arith.constant 0 : index
    %276 = vector.load %arg13[%c0_112, %c0_113] : memref<32x32xbf16, #tpu.memory_space<vmem>>, vector<32x32xbf16>
    %c0_114 = arith.constant 0 : index
    %c0_115 = arith.constant 0 : index
    %277 = vector.load %arg14[%c0_114, %c0_115] : memref<1x32xf32, #tpu.memory_space<vmem>>, vector<1x32xf32>
    %c0_116 = arith.constant 0 : index
    %c0_117 = arith.constant 0 : index
    %278 = vector.load %arg15[%c0_116, %c0_117] : memref<1x32xf32, #tpu.memory_space<vmem>>, vector<1x32xf32>
    %c0_118 = arith.constant 0 : index
    %c0_119 = arith.constant 0 : index
    %279 = vector.load %arg16[%c0_118, %c0_119] : memref<1x32xf32, #tpu.memory_space<vmem>>, vector<1x32xf32>
    %c0_120 = arith.constant 0 : index
    %c0_121 = arith.constant 0 : index
    %280 = vector.load %arg17[%c0_120, %c0_121] : memref<32x64xbf16, #tpu.memory_space<vmem>>, vector<32x64xbf16>
    %c0_122 = arith.constant 0 : index
    %c0_123 = arith.constant 0 : index
    %281 = vector.load %arg18[%c0_122, %c0_123] : memref<1x64xf32, #tpu.memory_space<vmem>>, vector<1x64xf32>
    %c0_124 = arith.constant 0 : index
    %c0_125 = arith.constant 0 : index
    %282 = vector.load %arg19[%c0_124, %c0_125] : memref<64x32xbf16, #tpu.memory_space<vmem>>, vector<64x32xbf16>
    %c0_126 = arith.constant 0 : index
    %c0_127 = arith.constant 0 : index
    %283 = vector.load %arg20[%c0_126, %c0_127] : memref<1x32xf32, #tpu.memory_space<vmem>>, vector<1x32xf32>
    %c0_128 = arith.constant 0 : index
    %c0_129 = arith.constant 0 : index
    %284 = vector.load %arg21[%c0_128, %c0_129] : memref<1x32xf32, #tpu.memory_space<vmem>>, vector<1x32xf32>
    %c0_130 = arith.constant 0 : index
    %c0_131 = arith.constant 0 : index
    %285 = vector.load %arg22[%c0_130, %c0_131] : memref<1x32xf32, #tpu.memory_space<vmem>>, vector<1x32xf32>
    %286 = arith.truncf %21 : vector<64x32xf32> to vector<64x32xbf16>
    %cst_132 = arith.constant dense<0.000000e+00> : vector<64x32xf32>
    %287 = tpu.matmul %286, %272, %cst_132 {dimension_numbers = #tpu.dot_dimension_numbers<[1], [0], [0], [1], [0, 0, 1, 1], [], []>} : vector<64x32xbf16>, vector<32x32xbf16>, vector<64x32xf32> -> vector<64x32xf32>
    %288 = vector.broadcast %273 : vector<1x32xf32> to vector<64x32xf32>
    %289 = arith.addf %287, %288 : vector<64x32xf32>
    %290 = vector.broadcast %269 : vector<64x1xf32> to vector<64x32xf32>
    %291 = vector.broadcast %274 : vector<1x32xf32> to vector<64x32xf32>
    %292 = arith.mulf %290, %291 : vector<64x32xf32>
    %293 = vector.broadcast %275 : vector<1x32xf32> to vector<64x32xf32>
    %294 = arith.addf %292, %293 : vector<64x32xf32>
    %295 = arith.truncf %255 : vector<128x64xf32> to vector<128x64xbf16>
    %296 = arith.truncf %289 : vector<64x32xf32> to vector<64x32xbf16>
    %cst_133 = arith.constant dense<0.000000e+00> : vector<128x32xf32>
    %297 = tpu.matmul %295, %296, %cst_133 {dimension_numbers = #tpu.dot_dimension_numbers<[1], [0], [0], [1], [0, 0, 1, 1], [], []>} : vector<128x64xbf16>, vector<64x32xbf16>, vector<128x32xf32> -> vector<128x32xf32>
    %298 = arith.truncf %255 : vector<128x64xf32> to vector<128x64xbf16>
    %299 = arith.truncf %294 : vector<64x32xf32> to vector<64x32xbf16>
    %cst_134 = arith.constant dense<0.000000e+00> : vector<128x32xf32>
    %300 = tpu.matmul %298, %299, %cst_134 {dimension_numbers = #tpu.dot_dimension_numbers<[1], [0], [0], [1], [0, 0, 1, 1], [], []>} : vector<128x64xbf16>, vector<64x32xbf16>, vector<128x32xf32> -> vector<128x32xf32>
    %301 = arith.truncf %20 : vector<8x32xf32> to vector<8x32xbf16>
    %cst_135 = arith.constant dense<0.000000e+00> : vector<8x32xf32>
    %302 = tpu.matmul %301, %270, %cst_135 {dimension_numbers = #tpu.dot_dimension_numbers<[1], [0], [0], [1], [0, 0, 1, 1], [], []>} : vector<8x32xbf16>, vector<32x32xbf16>, vector<8x32xf32> -> vector<8x32xf32>
    %303 = vector.broadcast %271 : vector<1x32xf32> to vector<8x32xf32>
    %304 = arith.addf %302, %303 : vector<8x32xf32>
    %305 = vector.shape_cast %304 : vector<8x32xf32> to vector<8x1x32xf32>
    %306 = vector.shape_cast %305 : vector<8x1x32xf32> to vector<8x1x32xf32>
    %307 = vector.broadcast %306 : vector<8x1x32xf32> to vector<8x16x32xf32>
    %308 = vector.shape_cast %307 : vector<8x16x32xf32> to vector<128x32xf32>
    %309 = arith.mulf %308, %297 : vector<128x32xf32>
    %310 = arith.truncf %309 : vector<128x32xf32> to vector<128x32xbf16>
    %311 = arith.truncf %268 : vector<32x32xf32> to vector<32x32xbf16>
    %cst_136 = arith.constant dense<0.000000e+00> : vector<128x32xf32>
    %312 = tpu.matmul %310, %311, %cst_136 {dimension_numbers = #tpu.dot_dimension_numbers<[1], [0], [0], [1], [0, 0, 1, 1], [], []>} : vector<128x32xbf16>, vector<32x32xbf16>, vector<128x32xf32> -> vector<128x32xf32>
    %313 = vector.shape_cast %312 : vector<128x32xf32> to vector<8x16x32xf32>
    %cst_137 = arith.constant dense<0xFF800000> : vector<8x32xf32>
    %314 = vector.multi_reduction <maximumf>, %313, %cst_137 [1] : vector<8x16x32xf32> to vector<8x32xf32>
    %315 = vector.shape_cast %314 : vector<8x32xf32> to vector<8x1x32xf32>
    %316 = vector.broadcast %315 : vector<8x1x32xf32> to vector<8x16x32xf32>
    %317 = arith.subf %313, %316 : vector<8x16x32xf32>
    %318 = math.exp %317 : vector<8x16x32xf32>
    %cst_138 = arith.constant dense<0.000000e+00> : vector<8x32xf32>
    %319 = vector.multi_reduction <add>, %318, %cst_138 [1] : vector<8x16x32xf32> to vector<8x32xf32>
    %320 = vector.shape_cast %319 : vector<8x32xf32> to vector<8x1x32xf32>
    %321 = vector.broadcast %320 : vector<8x1x32xf32> to vector<8x16x32xf32>
    %322 = arith.divf %318, %321 : vector<8x16x32xf32>
    %323 = vector.shape_cast %322 : vector<8x16x32xf32> to vector<128x32xf32>
    %324 = arith.mulf %323, %300 : vector<128x32xf32>
    %325 = vector.shape_cast %324 : vector<128x32xf32> to vector<8x16x32xf32>
    %cst_139 = arith.constant dense<0.000000e+00> : vector<8x32xf32>
    %326 = vector.multi_reduction <add>, %325, %cst_139 [1] : vector<8x16x32xf32> to vector<8x32xf32>
    %327 = arith.truncf %326 : vector<8x32xf32> to vector<8x32xbf16>
    %cst_140 = arith.constant dense<0.000000e+00> : vector<8x32xf32>
    %328 = tpu.matmul %327, %276, %cst_140 {dimension_numbers = #tpu.dot_dimension_numbers<[1], [0], [0], [1], [0, 0, 1, 1], [], []>} : vector<8x32xbf16>, vector<32x32xbf16>, vector<8x32xf32> -> vector<8x32xf32>
    %329 = vector.broadcast %277 : vector<1x32xf32> to vector<8x32xf32>
    %330 = arith.addf %328, %329 : vector<8x32xf32>
    %331 = arith.addf %20, %330 : vector<8x32xf32>
    %cst_141 = arith.constant dense<0.000000e+00> : vector<8xf32>
    %332 = vector.multi_reduction <add>, %331, %cst_141 [1] : vector<8x32xf32> to vector<8xf32>
    %333 = vector.shape_cast %332 : vector<8xf32> to vector<8x1xf32>
    %cst_142 = arith.constant 3.200000e+01 : f32
    %334 = vector.broadcast %cst_142 : f32 to vector<8x1xf32>
    %335 = arith.divf %333, %334 : vector<8x1xf32>
    %336 = vector.broadcast %335 : vector<8x1xf32> to vector<8x32xf32>
    %337 = arith.subf %331, %336 : vector<8x32xf32>
    %338 = vector.broadcast %335 : vector<8x1xf32> to vector<8x32xf32>
    %339 = arith.subf %331, %338 : vector<8x32xf32>
    %340 = arith.mulf %337, %339 : vector<8x32xf32>
    %cst_143 = arith.constant dense<0.000000e+00> : vector<8xf32>
    %341 = vector.multi_reduction <add>, %340, %cst_143 [1] : vector<8x32xf32> to vector<8xf32>
    %342 = vector.shape_cast %341 : vector<8xf32> to vector<8x1xf32>
    %cst_144 = arith.constant 3.200000e+01 : f32
    %343 = vector.broadcast %cst_144 : f32 to vector<8x1xf32>
    %344 = arith.divf %342, %343 : vector<8x1xf32>
    %345 = vector.broadcast %335 : vector<8x1xf32> to vector<8x32xf32>
    %346 = arith.subf %331, %345 : vector<8x32xf32>
    %cst_145 = arith.constant 9.99999974E-6 : f32
    %347 = vector.broadcast %cst_145 : f32 to vector<8x1xf32>
    %348 = arith.addf %344, %347 : vector<8x1xf32>
    %349 = math.rsqrt %348 : vector<8x1xf32>
    %350 = vector.broadcast %349 : vector<8x1xf32> to vector<8x32xf32>
    %351 = arith.mulf %346, %350 : vector<8x32xf32>
    %352 = vector.broadcast %278 : vector<1x32xf32> to vector<8x32xf32>
    %353 = arith.mulf %351, %352 : vector<8x32xf32>
    %354 = vector.broadcast %279 : vector<1x32xf32> to vector<8x32xf32>
    %355 = arith.addf %353, %354 : vector<8x32xf32>
    %356 = arith.truncf %355 : vector<8x32xf32> to vector<8x32xbf16>
    %cst_146 = arith.constant dense<0.000000e+00> : vector<8x64xf32>
    %357 = tpu.matmul %356, %280, %cst_146 {dimension_numbers = #tpu.dot_dimension_numbers<[1], [0], [0], [1], [0, 0, 1, 1], [], []>} : vector<8x32xbf16>, vector<32x64xbf16>, vector<8x64xf32> -> vector<8x64xf32>
    %358 = vector.broadcast %281 : vector<1x64xf32> to vector<8x64xf32>
    %359 = arith.addf %357, %358 : vector<8x64xf32>
    %cst_147 = arith.constant 0.000000e+00 : f32
    %360 = vector.broadcast %cst_147 : f32 to vector<8x64xf32>
    %361 = arith.maximumf %359, %360 : vector<8x64xf32>
    %362 = arith.truncf %361 : vector<8x64xf32> to vector<8x64xbf16>
    %cst_148 = arith.constant dense<0.000000e+00> : vector<8x32xf32>
    %363 = tpu.matmul %362, %282, %cst_148 {dimension_numbers = #tpu.dot_dimension_numbers<[1], [0], [0], [1], [0, 0, 1, 1], [], []>} : vector<8x64xbf16>, vector<64x32xbf16>, vector<8x32xf32> -> vector<8x32xf32>
    %364 = vector.broadcast %283 : vector<1x32xf32> to vector<8x32xf32>
    %365 = arith.addf %363, %364 : vector<8x32xf32>
    %366 = arith.addf %355, %365 : vector<8x32xf32>
    %cst_149 = arith.constant dense<0.000000e+00> : vector<8xf32>
    %367 = vector.multi_reduction <add>, %366, %cst_149 [1] : vector<8x32xf32> to vector<8xf32>
    %368 = vector.shape_cast %367 : vector<8xf32> to vector<8x1xf32>
    %cst_150 = arith.constant 3.200000e+01 : f32
    %369 = vector.broadcast %cst_150 : f32 to vector<8x1xf32>
    %370 = arith.divf %368, %369 : vector<8x1xf32>
    %371 = vector.broadcast %370 : vector<8x1xf32> to vector<8x32xf32>
    %372 = arith.subf %366, %371 : vector<8x32xf32>
    %373 = vector.broadcast %370 : vector<8x1xf32> to vector<8x32xf32>
    %374 = arith.subf %366, %373 : vector<8x32xf32>
    %375 = arith.mulf %372, %374 : vector<8x32xf32>
    %cst_151 = arith.constant dense<0.000000e+00> : vector<8xf32>
    %376 = vector.multi_reduction <add>, %375, %cst_151 [1] : vector<8x32xf32> to vector<8xf32>
    %377 = vector.shape_cast %376 : vector<8xf32> to vector<8x1xf32>
    %cst_152 = arith.constant 3.200000e+01 : f32
    %378 = vector.broadcast %cst_152 : f32 to vector<8x1xf32>
    %379 = arith.divf %377, %378 : vector<8x1xf32>
    %380 = vector.broadcast %370 : vector<8x1xf32> to vector<8x32xf32>
    %381 = arith.subf %366, %380 : vector<8x32xf32>
    %cst_153 = arith.constant 9.99999974E-6 : f32
    %382 = vector.broadcast %cst_153 : f32 to vector<8x1xf32>
    %383 = arith.addf %379, %382 : vector<8x1xf32>
    %384 = math.rsqrt %383 : vector<8x1xf32>
    %385 = vector.broadcast %384 : vector<8x1xf32> to vector<8x32xf32>
    %386 = arith.mulf %381, %385 : vector<8x32xf32>
    %387 = vector.broadcast %284 : vector<1x32xf32> to vector<8x32xf32>
    %388 = arith.mulf %386, %387 : vector<8x32xf32>
    %389 = vector.broadcast %285 : vector<1x32xf32> to vector<8x32xf32>
    %390 = arith.addf %388, %389 : vector<8x32xf32>
    %c0_154 = arith.constant 0 : index
    %c0_155 = arith.constant 0 : index
    %391 = vector.load %arg23[%c0_154, %c0_155] : memref<32x1xbf16, #tpu.memory_space<vmem>>, vector<32x1xbf16>
    %392 = arith.truncf %390 : vector<8x32xf32> to vector<8x32xbf16>
    %cst_156 = arith.constant dense<0.000000e+00> : vector<8x1xf32>
    %393 = tpu.matmul %392, %391, %cst_156 {dimension_numbers = #tpu.dot_dimension_numbers<[1], [0], [0], [1], [0, 0, 1, 1], [], []>} : vector<8x32xbf16>, vector<32x1xbf16>, vector<8x1xf32> -> vector<8x1xf32>
    %c0_157 = arith.constant 0 : index
    %c0_158 = arith.constant 0 : index
    %394 = vector.load %arg24[%c0_157, %c0_158] : memref<1x1xf32, #tpu.memory_space<vmem>>, vector<1x1xf32>
    %395 = vector.broadcast %394 : vector<1x1xf32> to vector<8x1xf32>
    %396 = arith.addf %393, %395 : vector<8x1xf32>
    %c0_159 = arith.constant 0 : index
    %c0_160 = arith.constant 0 : index
    %397 = vector.load %arg25[%c0_159, %c0_160] : memref<8x1xf32, #tpu.memory_space<vmem>>, vector<8x1xf32>
    tpu.vector_store %arg25[%c0_159, %c0_160], %396 {strides = array<i32>} : memref<8x1xf32, #tpu.memory_space<vmem>>, vector<8x1xf32>,
    return
  }
}

</mosaic_0001>

<llo_original>
// kernel: model_forward.1
$region0: #{model_forward.1}
  #allocation0 [shape = 'u32[]', space=smem, size = 0x4, offset = 0x4, fixed_abs, tag = 'smem constant byte address 0x4 - core index']
  #allocation1 [shape = 'u32[144,128]{1,0:T(1,128)}', space=vmem, size = 0x12000, scoped, tag = 'internal scratch']
  #allocation2 [shape = 'f32[1,1]{1,0:T(1,128)S(1)}', space=vmem, size = 0x200, scoped, tag = 'scoped memory for model_forward.1']
  %s0 = inlined_call_operand.vmem [shape: f32[8,8], index: 0, kind: input, shape index: {}]
  %s1 = inlined_call_operand.vmem [shape: f32[8,64], index: 1, kind: input, shape index: {}]
  %s2 = inlined_call_operand.vmem [shape: f32[1,64], index: 2, kind: input, shape index: {}]
  %s3 = inlined_call_operand.vmem [shape: f32[64,32], index: 3, kind: input, shape index: {}]
  %s4 = inlined_call_operand.vmem [shape: f32[1,32], index: 4, kind: input, shape index: {}]
  %s5 = inlined_call_operand.vmem [shape: f32[64,32], index: 5, kind: input, shape index: {}]
  %s6 = inlined_call_operand.vmem [shape: f32[64,1], index: 6, kind: input, shape index: {}]
  %s7 = inlined_call_operand.vmem [shape: bf16[32,32], index: 7, kind: input, shape index: {}]
  %s8 = inlined_call_operand.vmem [shape: f32[1,32], index: 8, kind: input, shape index: {}]
  %s9 = inlined_call_operand.vmem [shape: bf16[32,32], index: 9, kind: input, shape index: {}]
  %s10 = inlined_call_operand.vmem [shape: f32[1,32], index: 10, kind: input, shape index: {}]
  %s11 = inlined_call_operand.vmem [shape: f32[1,32], index: 11, kind: input, shape index: {}]
  %s12 = inlined_call_operand.vmem [shape: f32[1,32], index: 12, kind: input, shape index: {}]
  %s13 = inlined_call_operand.vmem [shape: bf16[32,32], index: 13, kind: input, shape index: {}]
  %s14 = inlined_call_operand.vmem [shape: f32[1,32], index: 14, kind: input, shape index: {}]
  %s15 = inlined_call_operand.vmem [shape: f32[1,32], index: 15, kind: input, shape index: {}]
  %s16 = inlined_call_operand.vmem [shape: f32[1,32], index: 16, kind: input, shape index: {}]
  %s17 = inlined_call_operand.vmem [shape: bf16[32,64], index: 17, kind: input, shape index: {}]
  %s18 = inlined_call_operand.vmem [shape: f32[1,64], index: 18, kind: input, shape index: {}]
  %s19 = inlined_call_operand.vmem [shape: bf16[64,32], index: 19, kind: input, shape index: {}]
  %s20 = inlined_call_operand.vmem [shape: f32[1,32], index: 20, kind: input, shape index: {}]
  %s21 = inlined_call_operand.vmem [shape: f32[1,32], index: 21, kind: input, shape index: {}]
  %s22 = inlined_call_operand.vmem [shape: f32[1,32], index: 22, kind: input, shape index: {}]
  %s23 = inlined_call_operand.vmem [shape: bf16[32,1], index: 23, kind: input, shape index: {}]
  %s24 = inlined_call_operand.<no memory space> [shape: f32[1,1], index: 24, kind: input, shape index: {}]
  %s25 = inlined_call_operand.vmem [shape: f32[8,1], index: 25, kind: output, shape index: {}]
  %s26 = sld [smem:[#allocation0]]
  $region110: #{model_forward.1} parent=0
    _
  %s28 = ssub.s32 1, %s26
  %s29 = scalar_select 0, %s28, %s26
  %v30 = vstv %s24
  %31 = vst [vmem:[#allocation2] sm:$0x1] %v30
  // Predicated region
  $region2: #{model_forward.1} parent=0 // pred_check
    _
  $region3: #{model_forward.1} parent=0 // pred_check_branch
    %33 = sbr.rel (0) target = $region5
  $region4: #{model_forward.1} parent=0 // pred_region
    _
  $region5: #{model_forward.1} parent=0 // pred_fallthru
    _
  // Predicated region
  $region6: #{model_forward.1} parent=0 // pred_check
    _
  $region7: #{model_forward.1} parent=0 // pred_check_branch
    %35 = sbr.rel (0) target = $region9
  $region8: #{model_forward.1} parent=0 // pred_region
    _
  $region9: #{model_forward.1} parent=0 // pred_fallthru
    _
  // Predicated region
  $region10: #{model_forward.1} parent=0 // pred_check
    _
  $region11: #{model_forward.1} parent=0 // pred_check_branch
    %37 = sbr.rel (0) target = $region13
  $region12: #{model_forward.1} parent=0 // pred_region
    _
  $region13: #{model_forward.1} parent=0 // pred_fallthru
    _
  // Predicated region
  $region14: #{model_forward.1} parent=0 // pred_check
    _
  $region15: #{model_forward.1} parent=0 // pred_check_branch
    %39 = sbr.rel (0) target = $region17
  $region16: #{model_forward.1} parent=0 // pred_region
    _
  $region17: #{model_forward.1} parent=0 // pred_fallthru
    _
  // Predicated region
  $region18: #{model_forward.1} parent=0 // pred_check
    _
  $region19: #{model_forward.1} parent=0 // pred_check_branch
    %41 = sbr.rel (0) target = $region21
  $region20: #{model_forward.1} parent=0 // pred_region
    _
  $region21: #{model_forward.1} parent=0 // pred_fallthru
    _
  // Predicated region
  $region22: #{model_forward.1} parent=0 // pred_check
    _
  $region23: #{model_forward.1} parent=0 // pred_check_branch
    %43 = sbr.rel (0) target = $region25
  $region24: #{model_forward.1} parent=0 // pred_region
    _
  $region25: #{model_forward.1} parent=0 // pred_fallthru
    _
  // Predicated region
  $region26: #{model_forward.1} parent=0 // pred_check
    _
  $region27: #{model_forward.1} parent=0 // pred_check_branch
    %45 = sbr.rel (0) target = $region29
  $region28: #{model_forward.1} parent=0 // pred_region
    _
  $region29: #{model_forward.1} parent=0 // pred_fallthru
    _
  // Predicated region
  $region30: #{model_forward.1} parent=0 // pred_check
    _
  $region31: #{model_forward.1} parent=0 // pred_check_branch
    %47 = sbr.rel (0) target = $region33
  $region32: #{model_forward.1} parent=0 // pred_region
    _
  $region33: #{model_forward.1} parent=0 // pred_fallthru
    _
  // Predicated region
  $region34: #{model_forward.1} parent=0 // pred_check
    _
  $region35: #{model_forward.1} parent=0 // pred_check_branch
    %49 = sbr.rel (0) target = $region37
  $region36: #{model_forward.1} parent=0 // pred_region
    _
  $region37: #{model_forward.1} parent=0 // pred_fallthru
    _
  // Predicated region
  $region38: #{model_forward.1} parent=0 // pred_check
    _
  $region39: #{model_forward.1} parent=0 // pred_check_branch
    %51 = sbr.rel (0) target = $region41
  $region40: #{model_forward.1} parent=0 // pred_region
    _
  $region41: #{model_forward.1} parent=0 // pred_fallthru
    _
  // Predicated region
  $region42: #{model_forward.1} parent=0 // pred_check
    _
  $region43: #{model_forward.1} parent=0 // pred_check_branch
    %53 = sbr.rel (0) target = $region45
  $region44: #{model_forward.1} parent=0 // pred_region
    _
  $region45: #{model_forward.1} parent=0 // pred_fallthru
    _
  // Predicated region
  $region46: #{model_forward.1} parent=0 // pred_check
    _
  $region47: #{model_forward.1} parent=0 // pred_check_branch
    %55 = sbr.rel (0) target = $region49
  $region48: #{model_forward.1} parent=0 // pred_region
    _
  $region49: #{model_forward.1} parent=0 // pred_fallthru
    _
  // Predicated region
  $region50: #{model_forward.1} parent=0 // pred_check
    _
  $region51: #{model_forward.1} parent=0 // pred_check_branch
    %57 = sbr.rel (0) target = $region53
  $region52: #{model_forward.1} parent=0 // pred_region
    _
  $region53: #{model_forward.1} parent=0 // pred_fallthru
    _
  // Predicated region
  $region54: #{model_forward.1} parent=0 // pred_check
    _
  $region55: #{model_forward.1} parent=0 // pred_check_branch
    %59 = sbr.rel (0) target = $region57
  $region56: #{model_forward.1} parent=0 // pred_region
    _
  $region57: #{model_forward.1} parent=0 // pred_fallthru
    _
  // Predicated region
  $region58: #{model_forward.1} parent=0 // pred_check
    _
  $region59: #{model_forward.1} parent=0 // pred_check_branch
    %61 = sbr.rel (0) target = $region61
  $region60: #{model_forward.1} parent=0 // pred_region
    _
  $region61: #{model_forward.1} parent=0 // pred_fallthru
    _
  // Predicated region
  $region62: #{model_forward.1} parent=0 // pred_check
    _
  $region63: #{model_forward.1} parent=0 // pred_check_branch
    %63 = sbr.rel (0) target = $region65
  $region64: #{model_forward.1} parent=0 // pred_region
    _
  $region65: #{model_forward.1} parent=0 // pred_fallthru
    _
  // Predicated region
  $region66: #{model_forward.1} parent=0 // pred_check
    _
  $region67: #{model_forward.1} parent=0 // pred_check_branch
    %65 = sbr.rel (0) target = $region69
  $region68: #{model_forward.1} parent=0 // pred_region
    _
  $region69: #{model_forward.1} parent=0 // pred_fallthru
    _
  // Predicated region
  $region70: #{model_forward.1} parent=0 // pred_check
    _
  $region71: #{model_forward.1} parent=0 // pred_check_branch
    %67 = sbr.rel (0) target = $region73
  $region72: #{model_forward.1} parent=0 // pred_region
    _
  $region73: #{model_forward.1} parent=0 // pred_fallthru
    _
  // Predicated region
  $region74: #{model_forward.1} parent=0 // pred_check
    _
  $region75: #{model_forward.1} parent=0 // pred_check_branch
    %69 = sbr.rel (0) target = $region77
  $region76: #{model_forward.1} parent=0 // pred_region
    _
  $region77: #{model_forward.1} parent=0 // pred_fallthru
    _
  // Predicated region
  $region78: #{model_forward.1} parent=0 // pred_check
    _
  $region79: #{model_forward.1} parent=0 // pred_check_branch
    %71 = sbr.rel (0) target = $region81
  $region80: #{model_forward.1} parent=0 // pred_region
    _
  $region81: #{model_forward.1} parent=0 // pred_fallthru
    _
  // Predicated region
  $region82: #{model_forward.1} parent=0 // pred_check
    _
  $region83: #{model_forward.1} parent=0 // pred_check_branch
    %73 = sbr.rel (0) target = $region85
  $region84: #{model_forward.1} parent=0 // pred_region
    _
  $region85: #{model_forward.1} parent=0 // pred_fallthru
    _
  // Predicated region
  $region86: #{model_forward.1} parent=0 // pred_check
    _
  $region87: #{model_forward.1} parent=0 // pred_check_branch
    %75 = sbr.rel (0) target = $region89
  $region88: #{model_forward.1} parent=0 // pred_region
    _
  $region89: #{model_forward.1} parent=0 // pred_fallthru
    _
  // Predicated region
  $region90: #{model_forward.1} parent=0 // pred_check
    _
  $region91: #{model_forward.1} parent=0 // pred_check_branch
    %77 = sbr.rel (0) target = $region93
  $region92: #{model_forward.1} parent=0 // pred_region
    _
  $region93: #{model_forward.1} parent=0 // pred_fallthru
    _
  // Predicated region
  $region94: #{model_forward.1} parent=0 // pred_check
    _
  $region95: #{model_forward.1} parent=0 // pred_check_branch
    %79 = sbr.rel (0) target = $region97
  $region96: #{model_forward.1} parent=0 // pred_region
    _
  $region97: #{model_forward.1} parent=0 // pred_fallthru
    _
  // Predicated region
  $region98: #{model_forward.1} parent=0 // pred_check
    _
  $region99: #{model_forward.1} parent=0 // pred_check_branch
    %81 = sbr.rel (0) target = $region101
  $region100: #{model_forward.1} parent=0 // pred_region
    _
  $region101: #{model_forward.1} parent=0 // pred_fallthru
    _
  %v83 = vld [vmem:[%s0] sm:$0xff]
  %v84 = vld [vmem:[%s1] sm:$0xff]
  %v85 = vld [vmem:[%s2] sm:$0x1]
  %v87 = vlaneseq
  %v88 = vshrl.u32 %v87, 7
  %v89 = vsub.s32 0, %v88
  %v90 = vrot.slane %v85, %v89
  %vm92 = vcmask 64512
  %v94 = vsel %vm92, %v83, 0
  %96 = vmatprep.subr.mxu0 0.0
  %97 = vmatpush1.msra.mxu0 %v84
  %98 = vmatprep.subr.mxu0 0.0
  %99 = vmatpush1.msra.mxu0 0.0
  %100 = vmatprep.subr.mxu0 0.0
  %101 = vmatpush1.msra.mxu0 0.0
  %102 = vmatprep.subr.mxu0 0.0
  %103 = vmatpush1.msra.mxu0 0.0
  %104 = vmatprep.subr.mxu0 0.0
  %105 = vmatpush1.msra.mxu0 0.0
  %106 = vmatprep.subr.mxu0 0.0
  %107 = vmatpush1.msra.mxu0 0.0
  %108 = vmatprep.subr.mxu0 0.0
  %109 = vmatpush1.msra.mxu0 0.0
  %110 = vmatprep.subr.mxu0 0.0
  %111 = vmatpush1.msra.mxu0 0.0
  %112 = vmatprep.subr.mxu0 0.0
  %113 = vmatpush1.msra.mxu0 0.0
  %114 = vmatprep.subr.mxu0 0.0
  %115 = vmatpush1.msra.mxu0 0.0
  %116 = vmatprep.subr.mxu0 0.0
  %117 = vmatpush1.msra.mxu0 0.0
  %118 = vmatprep.subr.mxu0 0.0
  %119 = vmatpush1.msra.mxu0 0.0
  %120 = vmatprep.subr.mxu0 0.0
  %121 = vmatpush1.msra.mxu0 0.0
  %122 = vmatprep.subr.mxu0 0.0
  %123 = vmatpush1.msra.mxu0 0.0
  %124 = vmatprep.subr.mxu0 0.0
  %125 = vmatpush1.msra.mxu0 0.0
  %126 = vmatprep.subr.mxu0 0.0
  %127 = vmatpush1.msra.mxu0 0.0
  %128 = vmatprep.subr.mxu0 0.0
  %129 = vmatpush1.msra.mxu0 0.0
  %130 = vmatprep.subr.mxu0 0.0
  %131 = vmatpush1.msra.mxu0 0.0
  %132 = vmatprep.subr.mxu0 0.0
  %133 = vmatpush1.msra.mxu0 0.0
  %134 = vmatprep.subr.mxu0 0.0
  %135 = vmatpush1.msra.mxu0 0.0
  %136 = vmatprep.subr.mxu0 0.0
  %137 = vmatpush1.msra.mxu0 0.0
  %138 = vmatprep.subr.mxu0 0.0
  %139 = vmatpush1.msra.mxu0 0.0
  %140 = vmatprep.subr.mxu0 0.0
  %141 = vmatpush1.msra.mxu0 0.0
  %142 = vmatprep.subr.mxu0 0.0
  %143 = vmatpush1.msra.mxu0 0.0
  %144 = vmatprep.subr.mxu0 0.0
  %145 = vmatpush1.msra.mxu0 0.0
  %146 = vmatprep.subr.mxu0 0.0
  %147 = vmatpush1.msra.mxu0 0.0
  %148 = vmatprep.subr.mxu0 0.0
  %149 = vmatpush1.msra.mxu0 0.0
  %150 = vmatprep.subr.mxu0 0.0
  %151 = vmatpush1.msra.mxu0 0.0
  %152 = vmatprep.subr.mxu0 0.0
  %153 = vmatpush1.msra.mxu0 0.0
  %154 = vmatprep.subr.mxu0 0.0
  %155 = vmatpush1.msra.mxu0 0.0
  %156 = vmatprep.subr.mxu0 0.0
  %157 = vmatpush1.msra.mxu0 0.0
  %158 = vmatprep.subr.mxu0 0.0
  %159 = vmatpush1.msra.mxu0 0.0
  %160 = vmatprep.mubr.f32.mxu0 0.0
  %161 = vmatmul.mubr.f32.gmra.mrb[0].mxu0 %v94
  %v162 = vpop.f32.mrb[0].mxu0
  %v163 = vadd.f32 %v90, %v162
  %v164 = vpop.f32.mrb[0].mxu0
  %165 = vdwg.mxu0
  %v166 = vmax.f32 %v163, 0.0
  %v167 = vld [vmem:[%s3] sm:$0xff]
  %v168 = vld [vmem:[%s3 + $0x8] sm:$0xff]
  %v169 = vld [vmem:[%s3 + $0x10] sm:$0xff]
  %v170 = vld [vmem:[%s3 + $0x18] sm:$0xff]
  %v171 = vld [vmem:[%s3 + $0x20] sm:$0xff]
  %v172 = vld [vmem:[%s3 + $0x28] sm:$0xff]
  %v173 = vld [vmem:[%s3 + $0x30] sm:$0xff]
  %v174 = vld [vmem:[%s3 + $0x38] sm:$0xff]
  %v175 = vld [vmem:[%s4] sm:$0x1]
  %v177 = vlaneseq
  %v178 = vshrl.u32 %v177, 7
  %v179 = vsub.s32 0, %v178
  %v180 = vrot.slane %v175, %v179
  %vm182 = vcmask 523264
  %v184 = vsel %vm182, %v166, 0
  %186 = vmatprep.subr.mxu0 0.0
  %187 = vmatpush1.msra.mxu0 %v167
  %188 = vmatprep.subr.mxu0 0.0
  %189 = vmatpush1.msra.mxu0 %v168
  %190 = vmatprep.subr.mxu0 0.0
  %191 = vmatpush1.msra.mxu0 %v169
  %192 = vmatprep.subr.mxu0 0.0
  %193 = vmatpush1.msra.mxu0 %v170
  %194 = vmatprep.subr.mxu0 0.0
  %195 = vmatpush1.msra.mxu0 %v171
  %196 = vmatprep.subr.mxu0 0.0
  %197 = vmatpush1.msra.mxu0 %v172
  %198 = vmatprep.subr.mxu0 0.0
  %199 = vmatpush1.msra.mxu0 %v173
  %200 = vmatprep.subr.mxu0 0.0
  %201 = vmatpush1.msra.mxu0 %v174
  %202 = vmatprep.subr.mxu0 0.0
  %203 = vmatpush1.msra.mxu0 0.0
  %204 = vmatprep.subr.mxu0 0.0
  %205 = vmatpush1.msra.mxu0 0.0
  %206 = vmatprep.subr.mxu0 0.0
  %207 = vmatpush1.msra.mxu0 0.0
  %208 = vmatprep.subr.mxu0 0.0
  %209 = vmatpush1.msra.mxu0 0.0
  %210 = vmatprep.subr.mxu0 0.0
  %211 = vmatpush1.msra.mxu0 0.0
  %212 = vmatprep.subr.mxu0 0.0
  %213 = vmatpush1.msra.mxu0 0.0
  %214 = vmatprep.subr.mxu0 0.0
  %215 = vmatpush1.msra.mxu0 0.0
  %216 = vmatprep.subr.mxu0 0.0
  %217 = vmatpush1.msra.mxu0 0.0
  %218 = vmatprep.subr.mxu0 0.0
  %219 = vmatpush1.msra.mxu0 0.0
  %220 = vmatprep.subr.mxu0 0.0
  %221 = vmatpush1.msra.mxu0 0.0
  %222 = vmatprep.subr.mxu0 0.0
  %223 = vmatpush1.msra.mxu0 0.0
  %224 = vmatprep.subr.mxu0 0.0
  %225 = vmatpush1.msra.mxu0 0.0
  %226 = vmatprep.subr.mxu0 0.0
  %227 = vmatpush1.msra.mxu0 0.0
  %228 = vmatprep.subr.mxu0 0.0
  %229 = vmatpush1.msra.mxu0 0.0
  %230 = vmatprep.subr.mxu0 0.0
  %231 = vmatpush1.msra.mxu0 0.0
  %232 = vmatprep.subr.mxu0 0.0
  %233 = vmatpush1.msra.mxu0 0.0
  %234 = vmatprep.subr.mxu0 0.0
  %235 = vmatpush1.msra.mxu0 0.0
  %236 = vmatprep.subr.mxu0 0.0
  %237 = vmatpush1.msra.mxu0 0.0
  %238 = vmatprep.subr.mxu0 0.0
  %239 = vmatpush1.msra.mxu0 0.0
  %240 = vmatprep.subr.mxu0 0.0
  %241 = vmatpush1.msra.mxu0 0.0
  %242 = vmatprep.subr.mxu0 0.0
  %243 = vmatpush1.msra.mxu0 0.0
  %244 = vmatprep.subr.mxu0 0.0
  %245 = vmatpush1.msra.mxu0 0.0
  %246 = vmatprep.subr.mxu0 0.0
  %247 = vmatpush1.msra.mxu0 0.0
  %248 = vmatprep.subr.mxu0 0.0
  %249 = vmatpush1.msra.mxu0 0.0
  %250 = vmatprep.mubr.f32.mxu0 0.0
  %251 = vmatmul.mubr.f32.gmra.mrb[0].mxu0 %v184
  %v252 = vpop.f32.mrb[0].mxu0
  %v253 = vadd.f32 %v180, %v252
  %v254 = vpop.f32.mrb[0].mxu0
  %255 = vdwg.mxu0
  %v256 = vmul.f32 %v253, %v253
  %vm257 = vcmask 261120
  %v258 = vsel %vm257, %v256, 0.0
  %259 = vadd.xlane.f32.xlu0 %v258
  %v260 = vpop.xlane.xlu0 %259
  %v261 = vmax.f32 %v260, 1e-24
  %v262 = vrsqrt.pop %v261
  %v263 = vmul.f32 %v253, %v262
  %v264 = vld [vmem:[%s5] sm:$0xff]
  %v265 = vld [vmem:[%s5 + $0x8] sm:$0xff]
  %v266 = vld [vmem:[%s5 + $0x10] sm:$0xff]
  %v267 = vld [vmem:[%s5 + $0x18] sm:$0xff]
  %v268 = vld [vmem:[%s5 + $0x20] sm:$0xff]
  %v269 = vld [vmem:[%s5 + $0x28] sm:$0xff]
  %v270 = vld [vmem:[%s5 + $0x30] sm:$0xff]
  %v271 = vld [vmem:[%s5 + $0x38] sm:$0xff]
  %v273 = vsel %vm257, %v263, 0
  %v276 = vsel %vm257, %v264, 0
  %v279 = vsel %vm257, %v265, 0
  %v282 = vsel %vm257, %v266, 0
  %v285 = vsel %vm257, %v267, 0
  %v288 = vsel %vm257, %v268, 0
  %v291 = vsel %vm257, %v269, 0
  %v294 = vsel %vm257, %v270, 0
  %v297 = vsel %vm257, %v271, 0
  %299 = vmatprep.subr.mxu0 0.0
  %300 = vmatpush1.xpose.msra.mxu0 %v276
  %301 = vmatprep.subr.mxu0 0.0
  %302 = vmatpush1.xpose.msra.mxu0 %v279
  %303 = vmatprep.subr.mxu0 0.0
  %304 = vmatpush1.xpose.msra.mxu0 %v282
  %305 = vmatprep.subr.mxu0 0.0
  %306 = vmatpush1.xpose.msra.mxu0 %v285
  %307 = vmatprep.subr.mxu0 0.0
  %308 = vmatpush1.xpose.msra.mxu0 %v288
  %309 = vmatprep.subr.mxu0 0.0
  %310 = vmatpush1.xpose.msra.mxu0 %v291
  %311 = vmatprep.subr.mxu0 0.0
  %312 = vmatpush1.xpose.msra.mxu0 %v294
  %313 = vmatprep.subr.mxu0 0.0
  %314 = vmatpush1.xpose.msra.mxu0 %v297
  %315 = vmatprep.subr.mxu0 0.0
  %316 = vmatpush1.xpose.msra.mxu0 0.0
  %317 = vmatprep.subr.mxu0 0.0
  %318 = vmatpush1.xpose.msra.mxu0 0.0
  %319 = vmatprep.subr.mxu0 0.0
  %320 = vmatpush1.xpose.msra.mxu0 0.0
  %321 = vmatprep.subr.mxu0 0.0
  %322 = vmatpush1.xpose.msra.mxu0 0.0
  %323 = vmatprep.subr.mxu0 0.0
  %324 = vmatpush1.xpose.msra.mxu0 0.0
  %325 = vmatprep.subr.mxu0 0.0
  %326 = vmatpush1.xpose.msra.mxu0 0.0
  %327 = vmatprep.subr.mxu0 0.0
  %328 = vmatpush1.xpose.msra.mxu0 0.0
  %329 = vmatprep.subr.mxu0 0.0
  %330 = vmatpush1.xpose.msra.mxu0 0.0
  %331 = vmatprep.subr.mxu0 0.0
  %332 = vmatpush1.xpose.msra.mxu0 0.0
  %333 = vmatprep.subr.mxu0 0.0
  %334 = vmatpush1.xpose.msra.mxu0 0.0
  %335 = vmatprep.subr.mxu0 0.0
  %336 = vmatpush1.xpose.msra.mxu0 0.0
  %337 = vmatprep.subr.mxu0 0.0
  %338 = vmatpush1.xpose.msra.mxu0 0.0
  %339 = vmatprep.subr.mxu0 0.0
  %340 = vmatpush1.xpose.msra.mxu0 0.0
  %341 = vmatprep.subr.mxu0 0.0
  %342 = vmatpush1.xpose.msra.mxu0 0.0
  %343 = vmatprep.subr.mxu0 0.0
  %344 = vmatpush1.xpose.msra.mxu0 0.0
  %345 = vmatprep.subr.mxu0 0.0
  %346 = vmatpush1.xpose.msra.mxu0 0.0
  %347 = vmatprep.subr.mxu0 0.0
  %348 = vmatpush1.xpose.msra.mxu0 0.0
  %349 = vmatprep.subr.mxu0 0.0
  %350 = vmatpush1.xpose.msra.mxu0 0.0
  %351 = vmatprep.subr.mxu0 0.0
  %352 = vmatpush1.xpose.msra.mxu0 0.0
  %353 = vmatprep.subr.mxu0 0.0
  %354 = vmatpush1.xpose.msra.mxu0 0.0
  %355 = vmatprep.subr.mxu0 0.0
  %356 = vmatpush1.xpose.msra.mxu0 0.0
  %357 = vmatprep.subr.mxu0 0.0
  %358 = vmatpush1.xpose.msra.mxu0 0.0
  %359 = vmatprep.subr.mxu0 0.0
  %360 = vmatpush1.xpose.msra.mxu0 0.0
  %361 = vmatprep.subr.mxu0 0.0
  %362 = vmatpush1.xpose.msra.mxu0 0.0
  %363 = vmatprep.mubr.f32.mxu0 0.0
  %364 = vmatmul.mubr.f32.gmra.mrb[0].mxu0 %v273
  %v365 = vpop.f32.mrb[0].mxu0
  %v366 = vadd.f32 0.0, %v365
  %v367 = vpop.f32.mrb[0].mxu0
  %368 = vdwg.mxu0
  %v369 = vlaneseq
  %v370 = vand.u32 %v369, 127
  %v371 = vcvt.s32.f32 %v370
  %v372 = vsel %vm182, %v366, -inf
  %373 = vmax.xlane.f32.xlu0 %v372
  %v374 = vpop.xlane.xlu0 %373
  %vm375 = vcmp.eq.f32.partialorder %v366, %v374
  %v376 = vsel %vm375, %v371, 64.0
  %v377 = vsel %vm182, %v376, inf
  %378 = vmin.xlane.f32.xlu0 %v377
  %v379 = vpop.xlane.xlu0 %378
  %vm380 = vcmp.eq.f32.partialorder %v371, %v379
  %v381 = vsel %vm380, 0.0, 16.0
  %v382 = vsel %vm380, -3e+38, %v366
  %v383 = vsel %vm182, %v382, -inf
  %384 = vmax.xlane.f32.xlu0 %v383
  %v385 = vpop.xlane.xlu0 %384
  %vm386 = vcmp.eq.f32.partialorder %v382, %v385
  %v387 = vsel %vm386, %v371, 64.0
  %v388 = vsel %vm182, %v387, inf
  %389 = vmin.xlane.f32.xlu0 %v388
  %v390 = vpop.xlane.xlu0 %389
  %vm391 = vcmp.eq.f32.partialorder %v371, %v390
  %v392 = vsel %vm391, 1.0, %v381
  %v393 = vsel %vm391, -3e+38, %v382
  %v394 = vsel %vm182, %v393, -inf
  %395 = vmax.xlane.f32.xlu0 %v394
  %v396 = vpop.xlane.xlu0 %395
  %vm397 = vcmp.eq.f32.partialorder %v393, %v396
  %v398 = vsel %vm397, %v371, 64.0
  %v399 = vsel %vm182, %v398, inf
  %400 = vmin.xlane.f32.xlu0 %v399
  %v401 = vpop.xlane.xlu0 %400
  %vm402 = vcmp.eq.f32.partialorder %v371, %v401
  %v403 = vsel %vm402, 2.0, %v392
  %v404 = vsel %vm402, -3e+38, %v393
  %v405 = vsel %vm182, %v404, -inf
  %406 = vmax.xlane.f32.xlu0 %v405
  %v407 = vpop.xlane.xlu0 %406
  %vm408 = vcmp.eq.f32.partialorder %v404, %v407
  %v409 = vsel %vm408, %v371, 64.0
  %v410 = vsel %vm182, %v409, inf
  %411 = vmin.xlane.f32.xlu0 %v410
  %v412 = vpop.xlane.xlu0 %411
  %vm413 = vcmp.eq.f32.partialorder %v371, %v412
  %v414 = vsel %vm413, 3.0, %v403
  %v415 = vsel %vm413, -3e+38, %v404
  %v416 = vsel %vm182, %v415, -inf
  %417 = vmax.xlane.f32.xlu0 %v416
  %v418 = vpop.xlane.xlu0 %417
  %vm419 = vcmp.eq.f32.partialorder %v415, %v418
  %v420 = vsel %vm419, %v371, 64.0
  %v421 = vsel %vm182, %v420, inf
  %422 = vmin.xlane.f32.xlu0 %v421
  %v423 = vpop.xlane.xlu0 %422
  %vm424 = vcmp.eq.f32.partialorder %v371, %v423
  %v425 = vsel %vm424, 4.0, %v414
  %v426 = vsel %vm424, -3e+38, %v415
  %v427 = vsel %vm182, %v426, -inf
  %428 = vmax.xlane.f32.xlu0 %v427
  %v429 = vpop.xlane.xlu0 %428
  %vm430 = vcmp.eq.f32.partialorder %v426, %v429
  %v431 = vsel %vm430, %v371, 64.0
  %v432 = vsel %vm182, %v431, inf
  %433 = vmin.xlane.f32.xlu0 %v432
  %v434 = vpop.xlane.xlu0 %433
  %vm435 = vcmp.eq.f32.partialorder %v371, %v434
  %v436 = vsel %vm435, 5.0, %v425
  %v437 = vsel %vm435, -3e+38, %v426
  %v438 = vsel %vm182, %v437, -inf
  %439 = vmax.xlane.f32.xlu0 %v438
  %v440 = vpop.xlane.xlu0 %439
  %vm441 = vcmp.eq.f32.partialorder %v437, %v440
  %v442 = vsel %vm441, %v371, 64.0
  %v443 = vsel %vm182, %v442, inf
  %444 = vmin.xlane.f32.xlu0 %v443
  %v445 = vpop.xlane.xlu0 %444
  %vm446 = vcmp.eq.f32.partialorder %v371, %v445
  %v447 = vsel %vm446, 6.0, %v436
  %v448 = vsel %vm446, -3e+38, %v437
  %v449 = vsel %vm182, %v448, -inf
  %450 = vmax.xlane.f32.xlu0 %v449
  %v451 = vpop.xlane.xlu0 %450
  %vm452 = vcmp.eq.f32.partialorder %v448, %v451
  %v453 = vsel %vm452, %v371, 64.0
  %v454 = vsel %vm182, %v453, inf
  %455 = vmin.xlane.f32.xlu0 %v454
  %v456 = vpop.xlane.xlu0 %455
  %vm457 = vcmp.eq.f32.partialorder %v371, %v456
  %v458 = vsel %vm457, 7.0, %v447
  %v459 = vsel %vm457, -3e+38, %v448
  %v460 = vsel %vm182, %v459, -inf
  %461 = vmax.xlane.f32.xlu0 %v460
  %v462 = vpop.xlane.xlu0 %461
  %vm463 = vcmp.eq.f32.partialorder %v459, %v462
  %v464 = vsel %vm463, %v371, 64.0
  %v465 = vsel %vm182, %v464, inf
  %466 = vmin.xlane.f32.xlu0 %v465
  %v467 = vpop.xlane.xlu0 %466
  %vm468 = vcmp.eq.f32.partialorder %v371, %v467
  %v469 = vsel %vm468, 8.0, %v458
  %v470 = vsel %vm468, -3e+38, %v459
  %v471 = vsel %vm182, %v470, -inf
  %472 = vmax.xlane.f32.xlu0 %v471
  %v473 = vpop.xlane.xlu0 %472
  %vm474 = vcmp.eq.f32.partialorder %v470, %v473
  %v475 = vsel %vm474, %v371, 64.0
  %v476 = vsel %vm182, %v475, inf
  %477 = vmin.xlane.f32.xlu0 %v476
  %v478 = vpop.xlane.xlu0 %477
  %vm479 = vcmp.eq.f32.partialorder %v371, %v478
  %v480 = vsel %vm479, 9.0, %v469
  %v481 = vsel %vm479, -3e+38, %v470
  %v482 = vsel %vm182, %v481, -inf
  %483 = vmax.xlane.f32.xlu0 %v482
  %v484 = vpop.xlane.xlu0 %483
  %vm485 = vcmp.eq.f32.partialorder %v481, %v484
  %v486 = vsel %vm485, %v371, 64.0
  %v487 = vsel %vm182, %v486, inf
  %488 = vmin.xlane.f32.xlu0 %v487
  %v489 = vpop.xlane.xlu0 %488
  %vm490 = vcmp.eq.f32.partialorder %v371, %v489
  %v491 = vsel %vm490, 10.0, %v480
  %v492 = vsel %vm490, -3e+38, %v481
  %v493 = vsel %vm182, %v492, -inf
  %494 = vmax.xlane.f32.xlu0 %v493
  %v495 = vpop.xlane.xlu0 %494
  %vm496 = vcmp.eq.f32.partialorder %v492, %v495
  %v497 = vsel %vm496, %v371, 64.0
  %v498 = vsel %vm182, %v497, inf
  %499 = vmin.xlane.f32.xlu0 %v498
  %v500 = vpop.xlane.xlu0 %499
  %vm501 = vcmp.eq.f32.partialorder %v371, %v500
  %v502 = vsel %vm501, 11.0, %v491
  %v503 = vsel %vm501, -3e+38, %v492
  %v504 = vsel %vm182, %v503, -inf
  %505 = vmax.xlane.f32.xlu0 %v504
  %v506 = vpop.xlane.xlu0 %505
  %vm507 = vcmp.eq.f32.partialorder %v503, %v506
  %v508 = vsel %vm507, %v371, 64.0
  %v509 = vsel %vm182, %v508, inf
  %510 = vmin.xlane.f32.xlu0 %v509
  %v511 = vpop.xlane.xlu0 %510
  %vm512 = vcmp.eq.f32.partialorder %v371, %v511
  %v513 = vsel %vm512, 12.0, %v502
  %v514 = vsel %vm512, -3e+38, %v503
  %v515 = vsel %vm182, %v514, -inf
  %516 = vmax.xlane.f32.xlu0 %v515
  %v517 = vpop.xlane.xlu0 %516
  %vm518 = vcmp.eq.f32.partialorder %v514, %v517
  %v519 = vsel %vm518, %v371, 64.0
  %v520 = vsel %vm182, %v519, inf
  %521 = vmin.xlane.f32.xlu0 %v520
  %v522 = vpop.xlane.xlu0 %521
  %vm523 = vcmp.eq.f32.partialorder %v371, %v522
  %v524 = vsel %vm523, 13.0, %v513
  %v525 = vsel %vm523, -3e+38, %v514
  %v526 = vsel %vm182, %v525, -inf
  %527 = vmax.xlane.f32.xlu0 %v526
  %v528 = vpop.xlane.xlu0 %527
  %vm529 = vcmp.eq.f32.partialorder %v525, %v528
  %v530 = vsel %vm529, %v371, 64.0
  %v531 = vsel %vm182, %v530, inf
  %532 = vmin.xlane.f32.xlu0 %v531
  %v533 = vpop.xlane.xlu0 %532
  %vm534 = vcmp.eq.f32.partialorder %v371, %v533
  %v535 = vsel %vm534, 14.0, %v524
  %v536 = vsel %vm534, -3e+38, %v525
  %v537 = vsel %vm182, %v536, -inf
  %538 = vmax.xlane.f32.xlu0 %v537
  %v539 = vpop.xlane.xlu0 %538
  %vm540 = vcmp.eq.f32.partialorder %v536, %v539
  %v541 = vsel %vm540, %v371, 64.0
  %v542 = vsel %vm182, %v541, inf
  %543 = vmin.xlane.f32.xlu0 %v542
  %v544 = vpop.xlane.xlu0 %543
  %vm545 = vcmp.eq.f32.partialorder %v371, %v544
  %v546 = vsel %vm545, 15.0, %v535
  %v547 = vlaneseq
  %v548 = vshrl.u32 %v547, 7
  %v549 = vadd.s32 %v548, 8
  %v550 = vcvt.s32.f32 %v548
  %v551 = vcvt.s32.f32 %v549
  %v553 = vcombine.high %v546, %v546
  %v555 = vunpack.c.l.s4 1966171168
  %v556 = vunpack.c.0.s8 %v555
  %v557 = vlaneseq
  %v558 = vshrl.u32 %v557, 7
  %v559 = vsub.s32 %v556, %v558
  %v560 = vrot.slane %v546, %v559
  %v562 = vunpack.c.l.s4 1966171168
  %v563 = vunpack.c.0.s8 %v562
  %v564 = vlaneseq
  %v565 = vshrl.u32 %v564, 7
  %v566 = vsub.s32 %v563, %v565
  %v567 = vrot.slane %v553, %v566
  %v568 = vcombine.high %v560, %v560
  %v569 = vcombine.high %v567, %v567
  %v571 = vunpack.c.l.s4 1966171168
  %v572 = vunpack.c.0.s8 %v571
  %v573 = vlaneseq
  %v574 = vshrl.u32 %v573, 7
  %v575 = vsub.s32 %v572, %v574
  %v576 = vrot.slane %v560, %v575
  %v578 = vunpack.c.l.s4 1966171168
  %v579 = vunpack.c.0.s8 %v578
  %v580 = vlaneseq
  %v581 = vshrl.u32 %v580, 7
  %v582 = vsub.s32 %v579, %v581
  %v583 = vrot.slane %v567, %v582
  %v585 = vunpack.c.l.s4 1966171168
  %v586 = vunpack.c.0.s8 %v585
  %v587 = vlaneseq
  %v588 = vshrl.u32 %v587, 7
  %v589 = vsub.s32 %v586, %v588
  %v590 = vrot.slane %v568, %v589
  %v592 = vunpack.c.l.s4 1966171168
  %v593 = vunpack.c.0.s8 %v592
  %v594 = vlaneseq
  %v595 = vshrl.u32 %v594, 7
  %v596 = vsub.s32 %v593, %v595
  %v597 = vrot.slane %v569, %v596
  %v598 = vcombine.high %v576, %v576
  %v599 = vcombine.high %v583, %v583
  %v600 = vcombine.high %v590, %v590
  %v601 = vcombine.high %v597, %v597
  %v602 = vlaneseq
  %v603 = vshrl.u32 %v602, 7
  %v604 = vsub.s32 0, %v603
  %v605 = vrot.slane %v576, %v604
  %v606 = vlaneseq
  %v607 = vshrl.u32 %v606, 7
  %v608 = vsub.s32 0, %v607
  %v609 = vrot.slane %v590, %v608
  %v610 = vlaneseq
  %v611 = vshrl.u32 %v610, 7
  %v612 = vsub.s32 0, %v611
  %v613 = vrot.slane %v598, %v612
  %v614 = vlaneseq
  %v615 = vshrl.u32 %v614, 7
  %v616 = vsub.s32 0, %v615
  %v617 = vrot.slane %v600, %v616
  %v618 = vlaneseq
  %v619 = vshrl.u32 %v618, 7
  %v620 = vsub.s32 0, %v619
  %v621 = vrot.slane %v583, %v620
  %v622 = vlaneseq
  %v623 = vshrl.u32 %v622, 7
  %v624 = vsub.s32 0, %v623
  %v625 = vrot.slane %v597, %v624
  %v626 = vlaneseq
  %v627 = vshrl.u32 %v626, 7
  %v628 = vsub.s32 0, %v627
  %v629 = vrot.slane %v599, %v628
  %v630 = vlaneseq
  %v631 = vshrl.u32 %v630, 7
  %v632 = vsub.s32 0, %v631
  %v633 = vrot.slane %v601, %v632
  %vm642 = vcmp.eq.f32.partialorder %v605, %v550
  %vm643 = vcmp.eq.f32.partialorder %v605, %v551
  %vm644 = vcmp.eq.f32.partialorder %v609, %v550
  %vm645 = vcmp.eq.f32.partialorder %v609, %v551
  %vm646 = vcmp.eq.f32.partialorder %v613, %v550
  %vm647 = vcmp.eq.f32.partialorder %v613, %v551
  %vm648 = vcmp.eq.f32.partialorder %v617, %v550
  %vm649 = vcmp.eq.f32.partialorder %v617, %v551
  %vm650 = vcmp.eq.f32.partialorder %v621, %v550
  %vm651 = vcmp.eq.f32.partialorder %v621, %v551
  %vm652 = vcmp.eq.f32.partialorder %v625, %v550
  %vm653 = vcmp.eq.f32.partialorder %v625, %v551
  %vm654 = vcmp.eq.f32.partialorder %v629, %v550
  %vm655 = vcmp.eq.f32.partialorder %v629, %v551
  %vm656 = vcmp.eq.f32.partialorder %v633, %v550
  %vm657 = vcmp.eq.f32.partialorder %v633, %v551
  %v658 = vsel %vm642, 1, 0
  %v659 = vsel %vm643, 1, 0
  %v660 = vsel %vm644, 1, 0
  %v661 = vsel %vm645, 1, 0
  %v662 = vsel %vm646, 1, 0
  %v663 = vsel %vm647, 1, 0
  %v664 = vsel %vm648, 1, 0
  %v665 = vsel %vm649, 1, 0
  %v666 = vsel %vm650, 1, 0
  %v667 = vsel %vm651, 1, 0
  %v668 = vsel %vm652, 1, 0
  %v669 = vsel %vm653, 1, 0
  %v670 = vsel %vm654, 1, 0
  %v671 = vsel %vm655, 1, 0
  %v672 = vsel %vm656, 1, 0
  %v673 = vsel %vm657, 1, 0
  %v674 = vcvt.s32.f32 %v658
  %v675 = vcvt.s32.f32 %v659
  %v676 = vcvt.s32.f32 %v660
  %v677 = vcvt.s32.f32 %v661
  %v678 = vcvt.s32.f32 %v662
  %v679 = vcvt.s32.f32 %v663
  %v680 = vcvt.s32.f32 %v664
  %v681 = vcvt.s32.f32 %v665
  %v682 = vcvt.s32.f32 %v666
  %v683 = vcvt.s32.f32 %v667
  %v684 = vcvt.s32.f32 %v668
  %v685 = vcvt.s32.f32 %v669
  %v686 = vcvt.s32.f32 %v670
  %v687 = vcvt.s32.f32 %v671
  %v688 = vcvt.s32.f32 %v672
  %v689 = vcvt.s32.f32 %v673
  %v690 = vadd.s32 %v548, 16
  %v691 = vadd.s32 %v548, 24
  %v692 = vcvt.s32.f32 %v690
  %v693 = vcvt.s32.f32 %v691
  %v694 = vmul.f32 %v550, 0.0625
  %v695 = vmul.f32 %v551, 0.0625
  %v696 = vmul.f32 %v692, 0.0625
  %v697 = vmul.f32 %v693, 0.0625
  %v698 = vfloor.f32 %v694
  %v699 = vfloor.f32 %v695
  %v700 = vfloor.f32 %v696
  %v701 = vfloor.f32 %v697
  %v702 = vmul.f32 %v371, 0.0625
  %v703 = vfloor.f32 %v702
  %vm704 = vcmp.eq.f32.partialorder %v698, %v703
  %vm705 = vcmp.eq.f32.partialorder %v699, %v703
  %vm706 = vcmp.eq.f32.partialorder %v700, %v703
  %vm707 = vcmp.eq.f32.partialorder %v701, %v703
  %v708 = vld [vmem:[%s6] sm:$0xff]
  %v709 = vld [vmem:[%s6 + $0x8] sm:$0xff]
  %v710 = vld [vmem:[%s6 + $0x10] sm:$0xff]
  %v711 = vld [vmem:[%s6 + $0x18] sm:$0xff]
  %v712 = vld [vmem:[%s6 + $0x20] sm:$0xff]
  %v713 = vld [vmem:[%s6 + $0x28] sm:$0xff]
  %v714 = vld [vmem:[%s6 + $0x30] sm:$0xff]
  %v715 = vld [vmem:[%s6 + $0x38] sm:$0xff]
  %v716 = vld [vmem:[%s7] sm:$0xf]
  %v717 = vld [vmem:[%s7 + $0x4] sm:$0xf]
  %v718 = vld [vmem:[%s7 + $0x8] sm:$0xf]
  %v719 = vld [vmem:[%s7 + $0xc] sm:$0xf]
  %v720 = vld [vmem:[%s8] sm:$0x1]
  %v721 = vld [vmem:[%s9] sm:$0xf]
  %v722 = vld [vmem:[%s9 + $0x4] sm:$0xf]
  %v723 = vld [vmem:[%s9 + $0x8] sm:$0xf]
  %v724 = vld [vmem:[%s9 + $0xc] sm:$0xf]
  %v725 = vld [vmem:[%s10] sm:$0x1]
  %v726 = vld [vmem:[%s11] sm:$0x1]
  %v727 = vld [vmem:[%s12] sm:$0x1]
  %v728 = vld [vmem:[%s13] sm:$0xf]
  %v729 = vld [vmem:[%s13 + $0x4] sm:$0xf]
  %v730 = vld [vmem:[%s13 + $0x8] sm:$0xf]
  %v731 = vld [vmem:[%s13 + $0xc] sm:$0xf]
  %v732 = vld [vmem:[%s14] sm:$0x1]
  %v733 = vld [vmem:[%s15] sm:$0x1]
  %v734 = vld [vmem:[%s16] sm:$0x1]
  %v735 = vld [vmem:[%s17] sm:$0xf]
  %v736 = vld [vmem:[%s17 + $0x4] sm:$0xf]
  %v737 = vld [vmem:[%s17 + $0x8] sm:$0xf]
  %v738 = vld [vmem:[%s17 + $0xc] sm:$0xf]
  %v739 = vld [vmem:[%s18] sm:$0x1]
  %v740 = vld [vmem:[%s19] sm:$0xf]
  %v741 = vld [vmem:[%s19 + $0x4] sm:$0xf]
  %v742 = vld [vmem:[%s19 + $0x8] sm:$0xf]
  %v743 = vld [vmem:[%s19 + $0xc] sm:$0xf]
  %v744 = vld [vmem:[%s19 + $0x10] sm:$0xf]
  %v745 = vld [vmem:[%s19 + $0x14] sm:$0xf]
  %v746 = vld [vmem:[%s19 + $0x18] sm:$0xf]
  %v747 = vld [vmem:[%s19 + $0x1c] sm:$0xf]
  %v748 = vld [vmem:[%s20] sm:$0x1]
  %v749 = vld [vmem:[%s21] sm:$0x1]
  %v750 = vld [vmem:[%s22] sm:$0x1]
  %v751 = vpack.c.bf16 %v265, %v264
  %v752 = vpack.c.bf16 %v267, %v266
  %v753 = vpack.c.bf16 %v269, %v268
  %v754 = vpack.c.bf16 %v271, %v270
  %v756 = vlaneseq
  %v757 = vshrl.u32 %v756, 7
  %v758 = vsub.s32 0, %v757
  %v759 = vrot.slane %v725, %v758
  %v765 = vunpack.c.l.b16 %v721
  %v766 = vunpack.c.l.b16 %v722
  %v767 = vunpack.c.l.b16 %v723
  %v768 = vunpack.c.l.b16 %v724
  %v769 = vpack.c.b16 %v766, %v765
  %v770 = vpack.c.b16 %v768, %v767
  %v774 = vsel %vm257, %v751, 0
  %v777 = vsel %vm257, %v752, 0
  %v780 = vsel %vm257, %v753, 0
  %v783 = vsel %vm257, %v754, 0
  %785 = vmatprep.subr.bf16.mxu0 0
  %786 = vmatpush1.bf16.msra.mxu0 %v769
  %787 = vmatprep.subr.bf16.mxu0 0
  %788 = vmatpush1.bf16.msra.mxu0 %v770
  %789 = vmatprep.subr.bf16.mxu0 0
  %790 = vmatpush1.bf16.msra.mxu0 0
  %791 = vmatprep.subr.bf16.mxu0 0
  %792 = vmatpush1.bf16.msra.mxu0 0
  %793 = vmatprep.subr.bf16.mxu0 0
  %794 = vmatpush1.bf16.msra.mxu0 0
  %795 = vmatprep.subr.bf16.mxu0 0
  %796 = vmatpush1.bf16.msra.mxu0 0
  %797 = vmatprep.subr.bf16.mxu0 0
  %798 = vmatpush1.bf16.msra.mxu0 0
  %799 = vmatprep.subr.bf16.mxu0 0
  %800 = vmatpush1.bf16.msra.mxu0 0
  %801 = vmatprep.subr.bf16.mxu0 0
  %802 = vmatpush1.bf16.msra.mxu0 0
  %803 = vmatprep.subr.bf16.mxu0 0
  %804 = vmatpush1.bf16.msra.mxu0 0
  %805 = vmatprep.subr.bf16.mxu0 0
  %806 = vmatpush1.bf16.msra.mxu0 0
  %807 = vmatprep.subr.bf16.mxu0 0
  %808 = vmatpush1.bf16.msra.mxu0 0
  %809 = vmatprep.subr.bf16.mxu0 0
  %810 = vmatpush1.bf16.msra.mxu0 0
  %811 = vmatprep.subr.bf16.mxu0 0
  %812 = vmatpush1.bf16.msra.mxu0 0
  %813 = vmatprep.subr.bf16.mxu0 0
  %814 = vmatpush1.bf16.msra.mxu0 0
  %815 = vmatprep.subr.bf16.mxu0 0
  %816 = vmatpush1.bf16.msra.mxu0 0
  %817 = vmatprep.mubr.bf16.mxu0 0
  %818 = vmatmul.mubr.bf16.gmra.mrb[0].mxu0 %v774
  %v819 = vpop.f32.mrb[0].mxu0
  %v820 = vadd.f32 %v759, %v819
  %v821 = vpop.f32.mrb[0].mxu0
  %v822 = vpop.f32.mrb[0].mxu0
  %v823 = vadd.f32 %v759, %v822
  %v824 = vpop.f32.mrb[0].mxu0
  %825 = vmatprep.mubr.bf16.mxu0 0
  %826 = vmatmul.mubr.bf16.gmra.mrb[0].mxu0 %v777
  %v827 = vpop.f32.mrb[0].mxu0
  %v828 = vadd.f32 %v759, %v827
  %v829 = vpop.f32.mrb[0].mxu0
  %v830 = vpop.f32.mrb[0].mxu0
  %v831 = vadd.f32 %v759, %v830
  %v832 = vpop.f32.mrb[0].mxu0
  %833 = vmatprep.mubr.bf16.mxu0 0
  %834 = vmatmul.mubr.bf16.gmra.mrb[0].mxu0 %v780
  %v835 = vpop.f32.mrb[0].mxu0
  %v836 = vadd.f32 %v759, %v835
  %v837 = vpop.f32.mrb[0].mxu0
  %v838 = vpop.f32.mrb[0].mxu0
  %v839 = vadd.f32 %v759, %v838
  %v840 = vpop.f32.mrb[0].mxu0
  %841 = vmatprep.mubr.bf16.mxu0 0
  %842 = vmatmul.mubr.bf16.gmra.mrb[0].mxu0 %v783
  %v843 = vpop.f32.mrb[0].mxu0
  %v844 = vadd.f32 %v759, %v843
  %v845 = vpop.f32.mrb[0].mxu0
  %v846 = vpop.f32.mrb[0].mxu0
  %v847 = vadd.f32 %v759, %v846
  %v848 = vpop.f32.mrb[0].mxu0
  %849 = vdwg.mxu0
  %851 = vset.pattern.permute.xlu0 0
  %852 = vperm.xlu0 %851, %v708
  %v853 = vpop.permute.xlu0 %852
  %856 = vset.pattern.permute.xlu0 0
  %857 = vperm.xlu0 %856, %v709
  %v858 = vpop.permute.xlu0 %857
  %861 = vset.pattern.permute.xlu0 0
  %862 = vperm.xlu0 %861, %v710
  %v863 = vpop.permute.xlu0 %862
  %866 = vset.pattern.permute.xlu0 0
  %867 = vperm.xlu0 %866, %v711
  %v868 = vpop.permute.xlu0 %867
  %871 = vset.pattern.permute.xlu0 0
  %872 = vperm.xlu0 %871, %v712
  %v873 = vpop.permute.xlu0 %872
  %876 = vset.pattern.permute.xlu0 0
  %877 = vperm.xlu0 %876, %v713
  %v878 = vpop.permute.xlu0 %877
  %881 = vset.pattern.permute.xlu0 0
  %882 = vperm.xlu0 %881, %v714
  %v883 = vpop.permute.xlu0 %882
  %886 = vset.pattern.permute.xlu0 0
  %887 = vperm.xlu0 %886, %v715
  %v888 = vpop.permute.xlu0 %887
  %v891 = vlaneseq
  %v892 = vshrl.u32 %v891, 7
  %v893 = vsub.s32 0, %v892
  %v894 = vrot.slane %v726, %v893
  %v896 = vmul.f32 %v853, %v894
  %v897 = vmul.f32 %v858, %v894
  %v898 = vmul.f32 %v863, %v894
  %v899 = vmul.f32 %v868, %v894
  %v900 = vmul.f32 %v873, %v894
  %v901 = vmul.f32 %v878, %v894
  %v902 = vmul.f32 %v883, %v894
  %v903 = vmul.f32 %v888, %v894
  %v905 = vlaneseq
  %v906 = vshrl.u32 %v905, 7
  %v907 = vsub.s32 0, %v906
  %v908 = vrot.slane %v727, %v907
  %v910 = vadd.f32 %v896, %v908
  %v911 = vadd.f32 %v897, %v908
  %v912 = vadd.f32 %v898, %v908
  %v913 = vadd.f32 %v899, %v908
  %v914 = vadd.f32 %v900, %v908
  %v915 = vadd.f32 %v901, %v908
  %v916 = vadd.f32 %v902, %v908
  %v917 = vadd.f32 %v903, %v908
  %v918 = vpack.c.bf16 %v675, %v674
  %v919 = vpack.c.bf16 %v677, %v676
  %v920 = vpack.c.bf16 %v679, %v678
  %v921 = vpack.c.bf16 %v681, %v680
  %v922 = vpack.c.bf16 %v683, %v682
  %v923 = vpack.c.bf16 %v685, %v684
  %v924 = vpack.c.bf16 %v687, %v686
  %v925 = vpack.c.bf16 %v689, %v688
  %v926 = vpack.c.bf16 %v823, %v820
  %v927 = vpack.c.bf16 %v831, %v828
  %v928 = vpack.c.bf16 %v839, %v836
  %v929 = vpack.c.bf16 %v847, %v844
  %v931 = vsel %vm182, %v918, 0
  %v934 = vsel %vm182, %v919, 0
  %v937 = vsel %vm182, %v920, 0
  %v940 = vsel %vm182, %v921, 0
  %v943 = vsel %vm182, %v922, 0
  %v946 = vsel %vm182, %v923, 0
  %v949 = vsel %vm182, %v924, 0
  %v952 = vsel %vm182, %v925, 0
  %954 = vmatprep.subr.bf16.mxu0 0
  %955 = vmatpush1.bf16.msra.mxu0 %v926
  %956 = vmatprep.subr.bf16.mxu0 0
  %957 = vmatpush1.bf16.msra.mxu0 %v927
  %958 = vmatprep.subr.bf16.mxu0 0
  %959 = vmatpush1.bf16.msra.mxu0 %v928
  %960 = vmatprep.subr.bf16.mxu0 0
  %961 = vmatpush1.bf16.msra.mxu0 %v929
  %962 = vmatprep.subr.bf16.mxu0 0
  %963 = vmatpush1.bf16.msra.mxu0 0
  %964 = vmatprep.subr.bf16.mxu0 0
  %965 = vmatpush1.bf16.msra.mxu0 0
  %966 = vmatprep.subr.bf16.mxu0 0
  %967 = vmatpush1.bf16.msra.mxu0 0
  %968 = vmatprep.subr.bf16.mxu0 0
  %969 = vmatpush1.bf16.msra.mxu0 0
  %970 = vmatprep.subr.bf16.mxu0 0
  %971 = vmatpush1.bf16.msra.mxu0 0
  %972 = vmatprep.subr.bf16.mxu0 0
  %973 = vmatpush1.bf16.msra.mxu0 0
  %974 = vmatprep.subr.bf16.mxu0 0
  %975 = vmatpush1.bf16.msra.mxu0 0
  %976 = vmatprep.subr.bf16.mxu0 0
  %977 = vmatpush1.bf16.msra.mxu0 0
  %978 = vmatprep.subr.bf16.mxu0 0
  %979 = vmatpush1.bf16.msra.mxu0 0
  %980 = vmatprep.subr.bf16.mxu0 0
  %981 = vmatpush1.bf16.msra.mxu0 0
  %982 = vmatprep.subr.bf16.mxu0 0
  %983 = vmatpush1.bf16.msra.mxu0 0
  %984 = vmatprep.subr.bf16.mxu0 0
  %985 = vmatpush1.bf16.msra.mxu0 0
  %986 = vmatprep.mubr.bf16.mxu0 0
  %987 = vmatmul.mubr.bf16.gmra.mrb[0].mxu0 %v931
  %v988 = vpop.f32.mrb[0].mxu0
  %v989 = vadd.f32 0.0, %v988
  %v990 = vpop.f32.mrb[0].mxu0
  %v991 = vpop.f32.mrb[0].mxu0
  %v992 = vadd.f32 0.0, %v991
  %v993 = vpop.f32.mrb[0].mxu0
  %994 = vmatprep.mubr.bf16.mxu0 0
  %995 = vmatmul.mubr.bf16.gmra.mrb[0].mxu0 %v934
  %v996 = vpop.f32.mrb[0].mxu0
  %v997 = vadd.f32 0.0, %v996
  %v998 = vpop.f32.mrb[0].mxu0
  %v999 = vpop.f32.mrb[0].mxu0
  %v1000 = vadd.f32 0.0, %v999
  %v1001 = vpop.f32.mrb[0].mxu0
  %1002 = vmatprep.mubr.bf16.mxu0 0
  %1003 = vmatmul.mubr.bf16.gmra.mrb[0].mxu0 %v937
  %v1004 = vpop.f32.mrb[0].mxu0
  %v1005 = vadd.f32 0.0, %v1004
  %v1006 = vpop.f32.mrb[0].mxu0
  %v1007 = vpop.f32.mrb[0].mxu0
  %v1008 = vadd.f32 0.0, %v1007
  %v1009 = vpop.f32.mrb[0].mxu0
  %1010 = vmatprep.mubr.bf16.mxu0 0
  %1011 = vmatmul.mubr.bf16.gmra.mrb[0].mxu0 %v940
  %v1012 = vpop.f32.mrb[0].mxu0
  %v1013 = vadd.f32 0.0, %v1012
  %v1014 = vpop.f32.mrb[0].mxu0
  %v1015 = vpop.f32.mrb[0].mxu0
  %v1016 = vadd.f32 0.0, %v1015
  %v1017 = vpop.f32.mrb[0].mxu0
  %1018 = vmatprep.mubr.bf16.mxu0 0
  %1019 = vmatmul.mubr.bf16.gmra.mrb[0].mxu0 %v943
  %v1020 = vpop.f32.mrb[0].mxu0
  %v1021 = vadd.f32 0.0, %v1020
  %v1022 = vpop.f32.mrb[0].mxu0
  %v1023 = vpop.f32.mrb[0].mxu0
  %v1024 = vadd.f32 0.0, %v1023
  %v1025 = vpop.f32.mrb[0].mxu0
  %1026 = vmatprep.mubr.bf16.mxu0 0
  %1027 = vmatmul.mubr.bf16.gmra.mrb[0].mxu0 %v946
  %v1028 = vpop.f32.mrb[0].mxu0
  %v1029 = vadd.f32 0.0, %v1028
  %v1030 = vpop.f32.mrb[0].mxu0
  %v1031 = vpop.f32.mrb[0].mxu0
  %v1032 = vadd.f32 0.0, %v1031
  %v1033 = vpop.f32.mrb[0].mxu0
  %1034 = vmatprep.mubr.bf16.mxu0 0
  %1035 = vmatmul.mubr.bf16.gmra.mrb[0].mxu0 %v949
  %v1036 = vpop.f32.mrb[0].mxu0
  %v1037 = vadd.f32 0.0, %v1036
  %v1038 = vpop.f32.mrb[0].mxu0
  %v1039 = vpop.f32.mrb[0].mxu0
  %v1040 = vadd.f32 0.0, %v1039
  %v1041 = vpop.f32.mrb[0].mxu0
  %1042 = vmatprep.mubr.bf16.mxu0 0
  %1043 = vmatmul.mubr.bf16.gmra.mrb[0].mxu0 %v952
  %v1044 = vpop.f32.mrb[0].mxu0
  %v1045 = vadd.f32 0.0, %v1044
  %v1046 = vpop.f32.mrb[0].mxu0
  %v1047 = vpop.f32.mrb[0].mxu0
  %v1048 = vadd.f32 0.0, %v1047
  %v1049 = vpop.f32.mrb[0].mxu0
  %1050 = vdwg.mxu0
  %v1051 = vpack.c.bf16 %v911, %v910
  %v1052 = vpack.c.bf16 %v913, %v912
  %v1053 = vpack.c.bf16 %v915, %v914
  %v1054 = vpack.c.bf16 %v917, %v916
  %1055 = vmatprep.subr.bf16.mxu0 0
  %1056 = vmatpush1.bf16.msra.mxu0 %v1051
  %1057 = vmatprep.subr.bf16.mxu0 0
  %1058 = vmatpush1.bf16.msra.mxu0 %v1052
  %1059 = vmatprep.subr.bf16.mxu0 0
  %1060 = vmatpush1.bf16.msra.mxu0 %v1053
  %1061 = vmatprep.subr.bf16.mxu0 0
  %1062 = vmatpush1.bf16.msra.mxu0 %v1054
  %1063 = vmatprep.subr.bf16.mxu0 0
  %1064 = vmatpush1.bf16.msra.mxu0 0
  %1065 = vmatprep.subr.bf16.mxu0 0
  %1066 = vmatpush1.bf16.msra.mxu0 0
  %1067 = vmatprep.subr.bf16.mxu0 0
  %1068 = vmatpush1.bf16.msra.mxu0 0
  %1069 = vmatprep.subr.bf16.mxu0 0
  %1070 = vmatpush1.bf16.msra.mxu0 0
  %1071 = vmatprep.subr.bf16.mxu0 0
  %1072 = vmatpush1.bf16.msra.mxu0 0
  %1073 = vmatprep.subr.bf16.mxu0 0
  %1074 = vmatpush1.bf16.msra.mxu0 0
  %1075 = vmatprep.subr.bf16.mxu0 0
  %1076 = vmatpush1.bf16.msra.mxu0 0
  %1077 = vmatprep.subr.bf16.mxu0 0
  %1078 = vmatpush1.bf16.msra.mxu0 0
  %1079 = vmatprep.subr.bf16.mxu0 0
  %1080 = vmatpush1.bf16.msra.mxu0 0
  %1081 = vmatprep.subr.bf16.mxu0 0
  %1082 = vmatpush1.bf16.msra.mxu0 0
  %1083 = vmatprep.subr.bf16.mxu0 0
  %1084 = vmatpush1.bf16.msra.mxu0 0
  %1085 = vmatprep.subr.bf16.mxu0 0
  %1086 = vmatpush1.bf16.msra.mxu0 0
  %1087 = vmatprep.mubr.bf16.mxu0 0
  %1088 = vmatmul.mubr.bf16.gmra.mrb[0].mxu0 %v931
  %v1089 = vpop.f32.mrb[0].mxu0
  %v1090 = vadd.f32 0.0, %v1089
  %v1091 = vpop.f32.mrb[0].mxu0
  %v1092 = vpop.f32.mrb[0].mxu0
  %v1093 = vadd.f32 0.0, %v1092
  %v1094 = vpop.f32.mrb[0].mxu0
  %1095 = vmatprep.mubr.bf16.mxu0 0
  %1096 = vmatmul.mubr.bf16.gmra.mrb[0].mxu0 %v934
  %v1097 = vpop.f32.mrb[0].mxu0
  %v1098 = vadd.f32 0.0, %v1097
  %v1099 = vpop.f32.mrb[0].mxu0
  %v1100 = vpop.f32.mrb[0].mxu0
  %v1101 = vadd.f32 0.0, %v1100
  %v1102 = vpop.f32.mrb[0].mxu0
  %1103 = vmatprep.mubr.bf16.mxu0 0
  %1104 = vmatmul.mubr.bf16.gmra.mrb[0].mxu0 %v937
  %v1105 = vpop.f32.mrb[0].mxu0
  %v1106 = vadd.f32 0.0, %v1105
  %v1107 = vpop.f32.mrb[0].mxu0
  %v1108 = vpop.f32.mrb[0].mxu0
  %v1109 = vadd.f32 0.0, %v1108
  %v1110 = vpop.f32.mrb[0].mxu0
  %1111 = vmatprep.mubr.bf16.mxu0 0
  %1112 = vmatmul.mubr.bf16.gmra.mrb[0].mxu0 %v940
  %v1113 = vpop.f32.mrb[0].mxu0
  %v1114 = vadd.f32 0.0, %v1113
  %v1115 = vpop.f32.mrb[0].mxu0
  %v1116 = vpop.f32.mrb[0].mxu0
  %v1117 = vadd.f32 0.0, %v1116
  %v1118 = vpop.f32.mrb[0].mxu0
  %1119 = vmatprep.mubr.bf16.mxu0 0
  %1120 = vmatmul.mubr.bf16.gmra.mrb[0].mxu0 %v943
  %v1121 = vpop.f32.mrb[0].mxu0
  %v1122 = vadd.f32 0.0, %v1121
  %v1123 = vpop.f32.mrb[0].mxu0
  %v1124 = vpop.f32.mrb[0].mxu0
  %v1125 = vadd.f32 0.0, %v1124
  %v1126 = vpop.f32.mrb[0].mxu0
  %1127 = vmatprep.mubr.bf16.mxu0 0
  %1128 = vmatmul.mubr.bf16.gmra.mrb[0].mxu0 %v946
  %v1129 = vpop.f32.mrb[0].mxu0
  %v1130 = vadd.f32 0.0, %v1129
  %v1131 = vpop.f32.mrb[0].mxu0
  %v1132 = vpop.f32.mrb[0].mxu0
  %v1133 = vadd.f32 0.0, %v1132
  %v1134 = vpop.f32.mrb[0].mxu0
  %1135 = vmatprep.mubr.bf16.mxu0 0
  %1136 = vmatmul.mubr.bf16.gmra.mrb[0].mxu0 %v949
  %v1137 = vpop.f32.mrb[0].mxu0
  %v1138 = vadd.f32 0.0, %v1137
  %v1139 = vpop.f32.mrb[0].mxu0
  %v1140 = vpop.f32.mrb[0].mxu0
  %v1141 = vadd.f32 0.0, %v1140
  %v1142 = vpop.f32.mrb[0].mxu0
  %1143 = vmatprep.mubr.bf16.mxu0 0
  %1144 = vmatmul.mubr.bf16.gmra.mrb[0].mxu0 %v952
  %v1145 = vpop.f32.mrb[0].mxu0
  %v1146 = vadd.f32 0.0, %v1145
  %v1147 = vpop.f32.mrb[0].mxu0
  %v1148 = vpop.f32.mrb[0].mxu0
  %v1149 = vadd.f32 0.0, %v1148
  %v1150 = vpop.f32.mrb[0].mxu0
  %1151 = vdwg.mxu0
  %v1152 = vpack.c.bf16 %v263, %v263
  %v1154 = vlaneseq
  %v1155 = vshrl.u32 %v1154, 7
  %v1156 = vsub.s32 0, %v1155
  %v1157 = vrot.slane %v720, %v1156
  %v1163 = vunpack.c.l.b16 %v716
  %v1164 = vunpack.c.l.b16 %v717
  %v1165 = vunpack.c.l.b16 %v718
  %v1166 = vunpack.c.l.b16 %v719
  %v1167 = vpack.c.b16 %v1164, %v1163
  %v1168 = vpack.c.b16 %v1166, %v1165
  %v1172 = vsel %vm257, %v1152, 0
  %1174 = vmatprep.subr.bf16.mxu0 0
  %1175 = vmatpush1.bf16.msra.mxu0 %v1167
  %1176 = vmatprep.subr.bf16.mxu0 0
  %1177 = vmatpush1.bf16.msra.mxu0 %v1168
  %1178 = vmatprep.subr.bf16.mxu0 0
  %1179 = vmatpush1.bf16.msra.mxu0 0
  %1180 = vmatprep.subr.bf16.mxu0 0
  %1181 = vmatpush1.bf16.msra.mxu0 0
  %1182 = vmatprep.subr.bf16.mxu0 0
  %1183 = vmatpush1.bf16.msra.mxu0 0
  %1184 = vmatprep.subr.bf16.mxu0 0
  %1185 = vmatpush1.bf16.msra.mxu0 0
  %1186 = vmatprep.subr.bf16.mxu0 0
  %1187 = vmatpush1.bf16.msra.mxu0 0
  %1188 = vmatprep.subr.bf16.mxu0 0
  %1189 = vmatpush1.bf16.msra.mxu0 0
  %1190 = vmatprep.subr.bf16.mxu0 0
  %1191 = vmatpush1.bf16.msra.mxu0 0
  %1192 = vmatprep.subr.bf16.mxu0 0
  %1193 = vmatpush1.bf16.msra.mxu0 0
  %1194 = vmatprep.subr.bf16.mxu0 0
  %1195 = vmatpush1.bf16.msra.mxu0 0
  %1196 = vmatprep.subr.bf16.mxu0 0
  %1197 = vmatpush1.bf16.msra.mxu0 0
  %1198 = vmatprep.subr.bf16.mxu0 0
  %1199 = vmatpush1.bf16.msra.mxu0 0
  %1200 = vmatprep.subr.bf16.mxu0 0
  %1201 = vmatpush1.bf16.msra.mxu0 0
  %1202 = vmatprep.subr.bf16.mxu0 0
  %1203 = vmatpush1.bf16.msra.mxu0 0
  %1204 = vmatprep.subr.bf16.mxu0 0
  %1205 = vmatpush1.bf16.msra.mxu0 0
  %1206 = vmatprep.mubr.bf16.mxu0 0
  %1207 = vmatmul.mubr.bf16.gmra.mrb[0].mxu0 %v1172
  %v1208 = vpop.f32.mrb[0].mxu0
  %v1209 = vadd.f32 %v1157, %v1208
  %v1210 = vpop.f32.mrb[0].mxu0
  %v1211 = vpop.f32.mrb[0].mxu0
  %v1212 = vpop.f32.mrb[0].mxu0
  %1213 = vdwg.mxu0
  %v1215 = vcombine.high %v1209, %v1209
  %v1217 = vunpack.c.l.s4 1966171168
  %v1218 = vunpack.c.0.s8 %v1217
  %v1219 = vlaneseq
  %v1220 = vshrl.u32 %v1219, 7
  %v1221 = vsub.s32 %v1218, %v1220
  %v1222 = vrot.slane %v1209, %v1221
  %v1224 = vunpack.c.l.s4 1966171168
  %v1225 = vunpack.c.0.s8 %v1224
  %v1226 = vlaneseq
  %v1227 = vshrl.u32 %v1226, 7
  %v1228 = vsub.s32 %v1225, %v1227
  %v1229 = vrot.slane %v1215, %v1228
  %v1230 = vcombine.high %v1222, %v1222
  %v1231 = vcombine.high %v1229, %v1229
  %v1233 = vunpack.c.l.s4 1966171168
  %v1234 = vunpack.c.0.s8 %v1233
  %v1235 = vlaneseq
  %v1236 = vshrl.u32 %v1235, 7
  %v1237 = vsub.s32 %v1234, %v1236
  %v1238 = vrot.slane %v1222, %v1237
  %v1240 = vunpack.c.l.s4 1966171168
  %v1241 = vunpack.c.0.s8 %v1240
  %v1242 = vlaneseq
  %v1243 = vshrl.u32 %v1242, 7
  %v1244 = vsub.s32 %v1241, %v1243
  %v1245 = vrot.slane %v1229, %v1244
  %v1247 = vunpack.c.l.s4 1966171168
  %v1248 = vunpack.c.0.s8 %v1247
  %v1249 = vlaneseq
  %v1250 = vshrl.u32 %v1249, 7
  %v1251 = vsub.s32 %v1248, %v1250
  %v1252 = vrot.slane %v1230, %v1251
  %v1254 = vunpack.c.l.s4 1966171168
  %v1255 = vunpack.c.0.s8 %v1254
  %v1256 = vlaneseq
  %v1257 = vshrl.u32 %v1256, 7
  %v1258 = vsub.s32 %v1255, %v1257
  %v1259 = vrot.slane %v1231, %v1258
  %v1260 = vcombine.high %v1238, %v1238
  %v1261 = vcombine.high %v1245, %v1245
  %v1262 = vcombine.high %v1252, %v1252
  %v1263 = vcombine.high %v1259, %v1259
  %v1264 = vlaneseq
  %v1265 = vshrl.u32 %v1264, 7
  %v1266 = vsub.s32 0, %v1265
  %v1267 = vrot.slane %v1238, %v1266
  %v1268 = vlaneseq
  %v1269 = vshrl.u32 %v1268, 7
  %v1270 = vsub.s32 0, %v1269
  %v1271 = vrot.slane %v1252, %v1270
  %v1272 = vlaneseq
  %v1273 = vshrl.u32 %v1272, 7
  %v1274 = vsub.s32 0, %v1273
  %v1275 = vrot.slane %v1260, %v1274
  %v1276 = vlaneseq
  %v1277 = vshrl.u32 %v1276, 7
  %v1278 = vsub.s32 0, %v1277
  %v1279 = vrot.slane %v1262, %v1278
  %v1280 = vlaneseq
  %v1281 = vshrl.u32 %v1280, 7
  %v1282 = vsub.s32 0, %v1281
  %v1283 = vrot.slane %v1245, %v1282
  %v1284 = vlaneseq
  %v1285 = vshrl.u32 %v1284, 7
  %v1286 = vsub.s32 0, %v1285
  %v1287 = vrot.slane %v1259, %v1286
  %v1288 = vlaneseq
  %v1289 = vshrl.u32 %v1288, 7
  %v1290 = vsub.s32 0, %v1289
  %v1291 = vrot.slane %v1261, %v1290
  %v1292 = vlaneseq
  %v1293 = vshrl.u32 %v1292, 7
  %v1294 = vsub.s32 0, %v1293
  %v1295 = vrot.slane %v1263, %v1294
  %v1304 = vmul.f32 %v1267, %v989
  %v1305 = vmul.f32 %v1267, %v992
  %v1306 = vmul.f32 %v1271, %v997
  %v1307 = vmul.f32 %v1271, %v1000
  %v1308 = vmul.f32 %v1275, %v1005
  %v1309 = vmul.f32 %v1275, %v1008
  %v1310 = vmul.f32 %v1279, %v1013
  %v1311 = vmul.f32 %v1279, %v1016
  %v1312 = vmul.f32 %v1283, %v1021
  %v1313 = vmul.f32 %v1283, %v1024
  %v1314 = vmul.f32 %v1287, %v1029
  %v1315 = vmul.f32 %v1287, %v1032
  %v1316 = vmul.f32 %v1291, %v1037
  %v1317 = vmul.f32 %v1291, %v1040
  %v1318 = vmul.f32 %v1295, %v1045
  %v1319 = vmul.f32 %v1295, %v1048
  %v1320 = vpack.c.bf16 %v1305, %v1304
  %v1321 = vpack.c.bf16 %v1307, %v1306
  %v1322 = vpack.c.bf16 %v1309, %v1308
  %v1323 = vpack.c.bf16 %v1311, %v1310
  %v1324 = vpack.c.bf16 %v1313, %v1312
  %v1325 = vpack.c.bf16 %v1315, %v1314
  %v1326 = vpack.c.bf16 %v1317, %v1316
  %v1327 = vpack.c.bf16 %v1319, %v1318
  %v1328 = vsel %vm704, 1, 0
  %v1329 = vsel %vm705, 1, 0
  %v1330 = vsel %vm706, 1, 0
  %v1331 = vsel %vm707, 1, 0
  %v1332 = vcvt.s32.f32 %v1328
  %v1333 = vcvt.s32.f32 %v1329
  %v1334 = vcvt.s32.f32 %v1330
  %v1335 = vcvt.s32.f32 %v1331
  %v1336 = vpack.c.bf16 %v1333, %v1332
  %v1337 = vpack.c.bf16 %v1335, %v1334
  %v1339 = vsel %vm257, %v1320, 0
  %v1342 = vsel %vm257, %v1321, 0
  %v1345 = vsel %vm257, %v1322, 0
  %v1348 = vsel %vm257, %v1323, 0
  %v1351 = vsel %vm257, %v1324, 0
  %v1354 = vsel %vm257, %v1325, 0
  %v1357 = vsel %vm257, %v1326, 0
  %v1360 = vsel %vm257, %v1327, 0
  %1362 = vmatprep.subr.bf16.mxu0 0
  %1363 = vmatpush1.bf16.msra.mxu0 %v1336
  %1364 = vmatprep.subr.bf16.mxu0 0
  %1365 = vmatpush1.bf16.msra.mxu0 %v1337
  %1366 = vmatprep.subr.bf16.mxu0 0
  %1367 = vmatpush1.bf16.msra.mxu0 0
  %1368 = vmatprep.subr.bf16.mxu0 0
  %1369 = vmatpush1.bf16.msra.mxu0 0
  %1370 = vmatprep.subr.bf16.mxu0 0
  %1371 = vmatpush1.bf16.msra.mxu0 0
  %1372 = vmatprep.subr.bf16.mxu0 0
  %1373 = vmatpush1.bf16.msra.mxu0 0
  %1374 = vmatprep.subr.bf16.mxu0 0
  %1375 = vmatpush1.bf16.msra.mxu0 0
  %1376 = vmatprep.subr.bf16.mxu0 0
  %1377 = vmatpush1.bf16.msra.mxu0 0
  %1378 = vmatprep.subr.bf16.mxu0 0
  %1379 = vmatpush1.bf16.msra.mxu0 0
  %1380 = vmatprep.subr.bf16.mxu0 0
  %1381 = vmatpush1.bf16.msra.mxu0 0
  %1382 = vmatprep.subr.bf16.mxu0 0
  %1383 = vmatpush1.bf16.msra.mxu0 0
  %1384 = vmatprep.subr.bf16.mxu0 0
  %1385 = vmatpush1.bf16.msra.mxu0 0
  %1386 = vmatprep.subr.bf16.mxu0 0
  %1387 = vmatpush1.bf16.msra.mxu0 0
  %1388 = vmatprep.subr.bf16.mxu0 0
  %1389 = vmatpush1.bf16.msra.mxu0 0
  %1390 = vmatprep.subr.bf16.mxu0 0
  %1391 = vmatpush1.bf16.msra.mxu0 0
  %1392 = vmatprep.subr.bf16.mxu0 0
  %1393 = vmatpush1.bf16.msra.mxu0 0
  %1394 = vmatprep.mubr.bf16.mxu0 0
  %1395 = vmatmul.mubr.bf16.gmra.mrb[0].mxu0 %v1339
  %v1396 = vpop.f32.mrb[0].mxu0
  %v1397 = vadd.f32 0.0, %v1396
  %v1398 = vpop.f32.mrb[0].mxu0
  %v1399 = vpop.f32.mrb[0].mxu0
  %v1400 = vadd.f32 0.0, %v1399
  %v1401 = vpop.f32.mrb[0].mxu0
  %1402 = vmatprep.mubr.bf16.mxu0 0
  %1403 = vmatmul.mubr.bf16.gmra.mrb[0].mxu0 %v1342
  %v1404 = vpop.f32.mrb[0].mxu0
  %v1405 = vadd.f32 0.0, %v1404
  %v1406 = vpop.f32.mrb[0].mxu0
  %v1407 = vpop.f32.mrb[0].mxu0
  %v1408 = vadd.f32 0.0, %v1407
  %v1409 = vpop.f32.mrb[0].mxu0
  %1410 = vmatprep.mubr.bf16.mxu0 0
  %1411 = vmatmul.mubr.bf16.gmra.mrb[0].mxu0 %v1345
  %v1412 = vpop.f32.mrb[0].mxu0
  %v1413 = vadd.f32 0.0, %v1412
  %v1414 = vpop.f32.mrb[0].mxu0
  %v1415 = vpop.f32.mrb[0].mxu0
  %v1416 = vadd.f32 0.0, %v1415
  %v1417 = vpop.f32.mrb[0].mxu0
  %1418 = vmatprep.mubr.bf16.mxu0 0
  %1419 = vmatmul.mubr.bf16.gmra.mrb[0].mxu0 %v1348
  %v1420 = vpop.f32.mrb[0].mxu0
  %v1421 = vadd.f32 0.0, %v1420
  %v1422 = vpop.f32.mrb[0].mxu0
  %v1423 = vpop.f32.mrb[0].mxu0
  %v1424 = vadd.f32 0.0, %v1423
  %v1425 = vpop.f32.mrb[0].mxu0
  %1426 = vmatprep.mubr.bf16.mxu0 0
  %1427 = vmatmul.mubr.bf16.gmra.mrb[0].mxu0 %v1351
  %v1428 = vpop.f32.mrb[0].mxu0
  %v1429 = vadd.f32 0.0, %v1428
  %v1430 = vpop.f32.mrb[0].mxu0
  %v1431 = vpop.f32.mrb[0].mxu0
  %v1432 = vadd.f32 0.0, %v1431
  %v1433 = vpop.f32.mrb[0].mxu0
  %1434 = vmatprep.mubr.bf16.mxu0 0
  %1435 = vmatmul.mubr.bf16.gmra.mrb[0].mxu0 %v1354
  %v1436 = vpop.f32.mrb[0].mxu0
  %v1437 = vadd.f32 0.0, %v1436
  %v1438 = vpop.f32.mrb[0].mxu0
  %v1439 = vpop.f32.mrb[0].mxu0
  %v1440 = vadd.f32 0.0, %v1439
  %v1441 = vpop.f32.mrb[0].mxu0
  %1442 = vmatprep.mubr.bf16.mxu0 0
  %1443 = vmatmul.mubr.bf16.gmra.mrb[0].mxu0 %v1357
  %v1444 = vpop.f32.mrb[0].mxu0
  %v1445 = vadd.f32 0.0, %v1444
  %v1446 = vpop.f32.mrb[0].mxu0
  %v1447 = vpop.f32.mrb[0].mxu0
  %v1448 = vadd.f32 0.0, %v1447
  %v1449 = vpop.f32.mrb[0].mxu0
  %1450 = vmatprep.mubr.bf16.mxu0 0
  %1451 = vmatmul.mubr.bf16.gmra.mrb[0].mxu0 %v1360
  %v1452 = vpop.f32.mrb[0].mxu0
  %v1453 = vadd.f32 0.0, %v1452
  %v1454 = vpop.f32.mrb[0].mxu0
  %v1455 = vpop.f32.mrb[0].mxu0
  %v1456 = vadd.f32 0.0, %v1455
  %v1457 = vpop.f32.mrb[0].mxu0
  %1458 = vdwg.mxu0
  %v1459 = vsel %vm257, %v1397, -inf
  %v1460 = vsel %vm257, %v1400, -inf
  %v1461 = vmax.f32 %v1459, %v1460
  %v1462 = vrot.slane %v1461, 4
  %v1463 = vmax.f32 %v1461, %v1462
  %v1464 = vrot.slane %v1463, 2
  %v1465 = vmax.f32 %v1463, %v1464
  %v1466 = vrot.slane %v1465, 1
  %v1467 = vmax.f32 %v1465, %v1466
  %v1468 = vsel %vm257, %v1405, -inf
  %v1469 = vsel %vm257, %v1408, -inf
  %v1470 = vmax.f32 %v1468, %v1469
  %v1471 = vrot.slane %v1470, 4
  %v1472 = vmax.f32 %v1470, %v1471
  %v1473 = vrot.slane %v1472, 2
  %v1474 = vmax.f32 %v1472, %v1473
  %v1475 = vrot.slane %v1474, 1
  %v1476 = vmax.f32 %v1474, %v1475
  %v1477 = vsel %vm257, %v1413, -inf
  %v1478 = vsel %vm257, %v1416, -inf
  %v1479 = vmax.f32 %v1477, %v1478
  %v1480 = vrot.slane %v1479, 4
  %v1481 = vmax.f32 %v1479, %v1480
  %v1482 = vrot.slane %v1481, 2
  %v1483 = vmax.f32 %v1481, %v1482
  %v1484 = vrot.slane %v1483, 1
  %v1485 = vmax.f32 %v1483, %v1484
  %v1486 = vsel %vm257, %v1421, -inf
  %v1487 = vsel %vm257, %v1424, -inf
  %v1488 = vmax.f32 %v1486, %v1487
  %v1489 = vrot.slane %v1488, 4
  %v1490 = vmax.f32 %v1488, %v1489
  %v1491 = vrot.slane %v1490, 2
  %v1492 = vmax.f32 %v1490, %v1491
  %v1493 = vrot.slane %v1492, 1
  %v1494 = vmax.f32 %v1492, %v1493
  %v1495 = vsel %vm257, %v1429, -inf
  %v1496 = vsel %vm257, %v1432, -inf
  %v1497 = vmax.f32 %v1495, %v1496
  %v1498 = vrot.slane %v1497, 4
  %v1499 = vmax.f32 %v1497, %v1498
  %v1500 = vrot.slane %v1499, 2
  %v1501 = vmax.f32 %v1499, %v1500
  %v1502 = vrot.slane %v1501, 1
  %v1503 = vmax.f32 %v1501, %v1502
  %v1504 = vsel %vm257, %v1437, -inf
  %v1505 = vsel %vm257, %v1440, -inf
  %v1506 = vmax.f32 %v1504, %v1505
  %v1507 = vrot.slane %v1506, 4
  %v1508 = vmax.f32 %v1506, %v1507
  %v1509 = vrot.slane %v1508, 2
  %v1510 = vmax.f32 %v1508, %v1509
  %v1511 = vrot.slane %v1510, 1
  %v1512 = vmax.f32 %v1510, %v1511
  %v1513 = vsel %vm257, %v1445, -inf
  %v1514 = vsel %vm257, %v1448, -inf
  %v1515 = vmax.f32 %v1513, %v1514
  %v1516 = vrot.slane %v1515, 4
  %v1517 = vmax.f32 %v1515, %v1516
  %v1518 = vrot.slane %v1517, 2
  %v1519 = vmax.f32 %v1517, %v1518
  %v1520 = vrot.slane %v1519, 1
  %v1521 = vmax.f32 %v1519, %v1520
  %v1522 = vsel %vm257, %v1453, -inf
  %v1523 = vsel %vm257, %v1456, -inf
  %v1524 = vmax.f32 %v1522, %v1523
  %v1525 = vrot.slane %v1524, 4
  %v1526 = vmax.f32 %v1524, %v1525
  %v1527 = vrot.slane %v1526, 2
  %v1528 = vmax.f32 %v1526, %v1527
  %v1529 = vrot.slane %v1528, 1
  %v1530 = vmax.f32 %v1528, %v1529
  %v1531 = vsub.f32 %v1397, %v1467
  %v1532 = vsub.f32 %v1400, %v1467
  %v1533 = vsub.f32 %v1405, %v1476
  %v1534 = vsub.f32 %v1408, %v1476
  %v1535 = vsub.f32 %v1413, %v1485
  %v1536 = vsub.f32 %v1416, %v1485
  %v1537 = vsub.f32 %v1421, %v1494
  %v1538 = vsub.f32 %v1424, %v1494
  %v1539 = vsub.f32 %v1429, %v1503
  %v1540 = vsub.f32 %v1432, %v1503
  %v1541 = vsub.f32 %v1437, %v1512
  %v1542 = vsub.f32 %v1440, %v1512
  %v1543 = vsub.f32 %v1445, %v1521
  %v1544 = vsub.f32 %v1448, %v1521
  %v1545 = vsub.f32 %v1453, %v1530
  %v1546 = vsub.f32 %v1456, %v1530
  %v1547 = vmul.f32 %v1531, 1.442695
  %v1548 = vpow.pop %v1547
  %v1549 = vmul.f32 %v1532, 1.442695
  %v1550 = vpow.pop %v1549
  %v1551 = vmul.f32 %v1533, 1.442695
  %v1552 = vpow.pop %v1551
  %v1553 = vmul.f32 %v1534, 1.442695
  %v1554 = vpow.pop %v1553
  %v1555 = vmul.f32 %v1535, 1.442695
  %v1556 = vpow.pop %v1555
  %v1557 = vmul.f32 %v1536, 1.442695
  %v1558 = vpow.pop %v1557
  %v1559 = vmul.f32 %v1537, 1.442695
  %v1560 = vpow.pop %v1559
  %v1561 = vmul.f32 %v1538, 1.442695
  %v1562 = vpow.pop %v1561
  %v1563 = vmul.f32 %v1539, 1.442695
  %v1564 = vpow.pop %v1563
  %v1565 = vmul.f32 %v1540, 1.442695
  %v1566 = vpow.pop %v1565
  %v1567 = vmul.f32 %v1541, 1.442695
  %v1568 = vpow.pop %v1567
  %v1569 = vmul.f32 %v1542, 1.442695
  %v1570 = vpow.pop %v1569
  %v1571 = vmul.f32 %v1543, 1.442695
  %v1572 = vpow.pop %v1571
  %v1573 = vmul.f32 %v1544, 1.442695
  %v1574 = vpow.pop %v1573
  %v1575 = vmul.f32 %v1545, 1.442695
  %v1576 = vpow.pop %v1575
  %v1577 = vmul.f32 %v1546, 1.442695
  %v1578 = vpow.pop %v1577
  %v1579 = vsel %vm257, %v1548, 0.0
  %v1580 = vsel %vm257, %v1550, 0.0
  %v1581 = vadd.f32 %v1579, %v1580
  %v1582 = vrot.slane %v1581, 4
  %v1583 = vadd.f32 %v1581, %v1582
  %v1584 = vrot.slane %v1583, 2
  %v1585 = vadd.f32 %v1583, %v1584
  %v1586 = vrot.slane %v1585, 1
  %v1587 = vadd.f32 %v1585, %v1586
  %v1588 = vsel %vm257, %v1552, 0.0
  %v1589 = vsel %vm257, %v1554, 0.0
  %v1590 = vadd.f32 %v1588, %v1589
  %v1591 = vrot.slane %v1590, 4
  %v1592 = vadd.f32 %v1590, %v1591
  %v1593 = vrot.slane %v1592, 2
  %v1594 = vadd.f32 %v1592, %v1593
  %v1595 = vrot.slane %v1594, 1
  %v1596 = vadd.f32 %v1594, %v1595
  %v1597 = vsel %vm257, %v1556, 0.0
  %v1598 = vsel %vm257, %v1558, 0.0
  %v1599 = vadd.f32 %v1597, %v1598
  %v1600 = vrot.slane %v1599, 4
  %v1601 = vadd.f32 %v1599, %v1600
  %v1602 = vrot.slane %v1601, 2
  %v1603 = vadd.f32 %v1601, %v1602
  %v1604 = vrot.slane %v1603, 1
  %v1605 = vadd.f32 %v1603, %v1604
  %v1606 = vsel %vm257, %v1560, 0.0
  %v1607 = vsel %vm257, %v1562, 0.0
  %v1608 = vadd.f32 %v1606, %v1607
  %v1609 = vrot.slane %v1608, 4
  %v1610 = vadd.f32 %v1608, %v1609
  %v1611 = vrot.slane %v1610, 2
  %v1612 = vadd.f32 %v1610, %v1611
  %v1613 = vrot.slane %v1612, 1
  %v1614 = vadd.f32 %v1612, %v1613
  %v1615 = vsel %vm257, %v1564, 0.0
  %v1616 = vsel %vm257, %v1566, 0.0
  %v1617 = vadd.f32 %v1615, %v1616
  %v1618 = vrot.slane %v1617, 4
  %v1619 = vadd.f32 %v1617, %v1618
  %v1620 = vrot.slane %v1619, 2
  %v1621 = vadd.f32 %v1619, %v1620
  %v1622 = vrot.slane %v1621, 1
  %v1623 = vadd.f32 %v1621, %v1622
  %v1624 = vsel %vm257, %v1568, 0.0
  %v1625 = vsel %vm257, %v1570, 0.0
  %v1626 = vadd.f32 %v1624, %v1625
  %v1627 = vrot.slane %v1626, 4
  %v1628 = vadd.f32 %v1626, %v1627
  %v1629 = vrot.slane %v1628, 2
  %v1630 = vadd.f32 %v1628, %v1629
  %v1631 = vrot.slane %v1630, 1
  %v1632 = vadd.f32 %v1630, %v1631
  %v1633 = vsel %vm257, %v1572, 0.0
  %v1634 = vsel %vm257, %v1574, 0.0
  %v1635 = vadd.f32 %v1633, %v1634
  %v1636 = vrot.slane %v1635, 4
  %v1637 = vadd.f32 %v1635, %v1636
  %v1638 = vrot.slane %v1637, 2
  %v1639 = vadd.f32 %v1637, %v1638
  %v1640 = vrot.slane %v1639, 1
  %v1641 = vadd.f32 %v1639, %v1640
  %v1642 = vsel %vm257, %v1576, 0.0
  %v1643 = vsel %vm257, %v1578, 0.0
  %v1644 = vadd.f32 %v1642, %v1643
  %v1645 = vrot.slane %v1644, 4
  %v1646 = vadd.f32 %v1644, %v1645
  %v1647 = vrot.slane %v1646, 2
  %v1648 = vadd.f32 %v1646, %v1647
  %v1649 = vrot.slane %v1648, 1
  %v1650 = vadd.f32 %v1648, %v1649
  %v1651 = vrcp.pop %v1587
  %v1652 = vmul.f32 %v1548, %v1651
  %v1653 = vmul.f32 %v1550, %v1651
  %v1654 = vrcp.pop %v1596
  %v1655 = vmul.f32 %v1552, %v1654
  %v1656 = vmul.f32 %v1554, %v1654
  %v1657 = vrcp.pop %v1605
  %v1658 = vmul.f32 %v1556, %v1657
  %v1659 = vmul.f32 %v1558, %v1657
  %v1660 = vrcp.pop %v1614
  %v1661 = vmul.f32 %v1560, %v1660
  %v1662 = vmul.f32 %v1562, %v1660
  %v1663 = vrcp.pop %v1623
  %v1664 = vmul.f32 %v1564, %v1663
  %v1665 = vmul.f32 %v1566, %v1663
  %v1666 = vrcp.pop %v1632
  %v1667 = vmul.f32 %v1568, %v1666
  %v1668 = vmul.f32 %v1570, %v1666
  %v1669 = vrcp.pop %v1641
  %v1670 = vmul.f32 %v1572, %v1669
  %v1671 = vmul.f32 %v1574, %v1669
  %v1672 = vrcp.pop %v1650
  %v1673 = vmul.f32 %v1576, %v1672
  %v1674 = vmul.f32 %v1578, %v1672
  %v1675 = vmul.f32 %v1652, %v1090
  %v1676 = vmul.f32 %v1653, %v1093
  %v1677 = vmul.f32 %v1655, %v1098
  %v1678 = vmul.f32 %v1656, %v1101
  %v1679 = vmul.f32 %v1658, %v1106
  %v1680 = vmul.f32 %v1659, %v1109
  %v1681 = vmul.f32 %v1661, %v1114
  %v1682 = vmul.f32 %v1662, %v1117
  %v1683 = vmul.f32 %v1664, %v1122
  %v1684 = vmul.f32 %v1665, %v1125
  %v1685 = vmul.f32 %v1667, %v1130
  %v1686 = vmul.f32 %v1668, %v1133
  %v1687 = vmul.f32 %v1670, %v1138
  %v1688 = vmul.f32 %v1671, %v1141
  %v1689 = vmul.f32 %v1673, %v1146
  %v1690 = vmul.f32 %v1674, %v1149
  %v1691 = vsel %vm257, %v1675, 0.0
  %v1692 = vsel %vm257, %v1676, 0.0
  %v1693 = vadd.f32 %v1691, %v1692
  %v1694 = vrot.slane %v1693, 4
  %v1695 = vadd.f32 %v1693, %v1694
  %v1696 = vrot.slane %v1695, 2
  %v1697 = vadd.f32 %v1695, %v1696
  %v1698 = vrot.slane %v1697, 1
  %v1699 = vadd.f32 %v1697, %v1698
  %v1700 = vsel %vm257, %v1677, 0.0
  %v1701 = vsel %vm257, %v1678, 0.0
  %v1702 = vadd.f32 %v1700, %v1701
  %v1703 = vrot.slane %v1702, 4
  %v1704 = vadd.f32 %v1702, %v1703
  %v1705 = vrot.slane %v1704, 2
  %v1706 = vadd.f32 %v1704, %v1705
  %v1707 = vrot.slane %v1706, 1
  %v1708 = vadd.f32 %v1706, %v1707
  %v1709 = vsel %vm257, %v1679, 0.0
  %v1710 = vsel %vm257, %v1680, 0.0
  %v1711 = vadd.f32 %v1709, %v1710
  %v1712 = vrot.slane %v1711, 4
  %v1713 = vadd.f32 %v1711, %v1712
  %v1714 = vrot.slane %v1713, 2
  %v1715 = vadd.f32 %v1713, %v1714
  %v1716 = vrot.slane %v1715, 1
  %v1717 = vadd.f32 %v1715, %v1716
  %v1718 = vsel %vm257, %v1681, 0.0
  %v1719 = vsel %vm257, %v1682, 0.0
  %v1720 = vadd.f32 %v1718, %v1719
  %v1721 = vrot.slane %v1720, 4
  %v1722 = vadd.f32 %v1720, %v1721
  %v1723 = vrot.slane %v1722, 2
  %v1724 = vadd.f32 %v1722, %v1723
  %v1725 = vrot.slane %v1724, 1
  %v1726 = vadd.f32 %v1724, %v1725
  %v1727 = vsel %vm257, %v1683, 0.0
  %v1728 = vsel %vm257, %v1684, 0.0
  %v1729 = vadd.f32 %v1727, %v1728
  %v1730 = vrot.slane %v1729, 4
  %v1731 = vadd.f32 %v1729, %v1730
  %v1732 = vrot.slane %v1731, 2
  %v1733 = vadd.f32 %v1731, %v1732
  %v1734 = vrot.slane %v1733, 1
  %v1735 = vadd.f32 %v1733, %v1734
  %v1736 = vsel %vm257, %v1685, 0.0
  %v1737 = vsel %vm257, %v1686, 0.0
  %v1738 = vadd.f32 %v1736, %v1737
  %v1739 = vrot.slane %v1738, 4
  %v1740 = vadd.f32 %v1738, %v1739
  %v1741 = vrot.slane %v1740, 2
  %v1742 = vadd.f32 %v1740, %v1741
  %v1743 = vrot.slane %v1742, 1
  %v1744 = vadd.f32 %v1742, %v1743
  %v1745 = vsel %vm257, %v1687, 0.0
  %v1746 = vsel %vm257, %v1688, 0.0
  %v1747 = vadd.f32 %v1745, %v1746
  %v1748 = vrot.slane %v1747, 4
  %v1749 = vadd.f32 %v1747, %v1748
  %v1750 = vrot.slane %v1749, 2
  %v1751 = vadd.f32 %v1749, %v1750
  %v1752 = vrot.slane %v1751, 1
  %v1753 = vadd.f32 %v1751, %v1752
  %v1754 = vsel %vm257, %v1689, 0.0
  %v1755 = vsel %vm257, %v1690, 0.0
  %v1756 = vadd.f32 %v1754, %v1755
  %v1757 = vrot.slane %v1756, 4
  %v1758 = vadd.f32 %v1756, %v1757
  %v1759 = vrot.slane %v1758, 2
  %v1760 = vadd.f32 %v1758, %v1759
  %v1761 = vrot.slane %v1760, 1
  %v1762 = vadd.f32 %v1760, %v1761
  %v1763 = vpack.c.bf16 %v1699, %v1699
  %v1764 = vpack.c.bf16 %v1708, %v1708
  %v1765 = vpack.c.bf16 %v1717, %v1717
  %v1766 = vpack.c.bf16 %v1726, %v1726
  %v1767 = vpack.c.bf16 %v1735, %v1735
  %v1768 = vpack.c.bf16 %v1744, %v1744
  %v1769 = vpack.c.bf16 %v1753, %v1753
  %v1770 = vpack.c.bf16 %v1762, %v1762
  %v1772 = vlaneseq
  %v1773 = vshrl.u32 %v1772, 7
  %v1774 = vsub.s32 0, %v1773
  %v1775 = vrot.slane %v732, %v1774
  %v1785 = vunpack.c.l.b16 %v1763
  %v1786 = vunpack.c.l.b16 %v1764
  %v1787 = vunpack.c.l.b16 %v1765
  %v1788 = vunpack.c.l.b16 %v1766
  %v1789 = vunpack.c.l.b16 %v1767
  %v1790 = vunpack.c.l.b16 %v1768
  %v1791 = vunpack.c.l.b16 %v1769
  %v1792 = vunpack.c.l.b16 %v1770
  %vm1793 = vcmask 1041409
  %v1794 = vsel %vm1793, %v1786, %v1785
  %vm1795 = vcmask 1042434
  %v1796 = vsel %vm1795, %v1787, %v1794
  %vm1797 = vcmask 1043459
  %v1798 = vsel %vm1797, %v1788, %v1796
  %vm1799 = vcmask 1044484
  %v1800 = vsel %vm1799, %v1789, %v1798
  %vm1801 = vcmask 1045509
  %v1802 = vsel %vm1801, %v1790, %v1800
  %vm1803 = vcmask 1046534
  %v1804 = vsel %vm1803, %v1791, %v1802
  %vm1805 = vcmask 1047559
  %v1806 = vsel %vm1805, %v1792, %v1804
  %v1807 = vpack.c.b16 %v1806, %v1806
  %v1812 = vunpack.c.l.b16 %v728
  %v1813 = vunpack.c.l.b16 %v729
  %v1814 = vunpack.c.l.b16 %v730
  %v1815 = vunpack.c.l.b16 %v731
  %v1816 = vpack.c.b16 %v1813, %v1812
  %v1817 = vpack.c.b16 %v1815, %v1814
  %v1821 = vsel %vm257, %v1807, 0
  %1823 = vmatprep.subr.bf16.mxu0 0
  %1824 = vmatpush1.bf16.msra.mxu0 %v1816
  %1825 = vmatprep.subr.bf16.mxu0 0
  %1826 = vmatpush1.bf16.msra.mxu0 %v1817
  %1827 = vmatprep.subr.bf16.mxu0 0
  %1828 = vmatpush1.bf16.msra.mxu0 0
  %1829 = vmatprep.subr.bf16.mxu0 0
  %1830 = vmatpush1.bf16.msra.mxu0 0
  %1831 = vmatprep.subr.bf16.mxu0 0
  %1832 = vmatpush1.bf16.msra.mxu0 0
  %1833 = vmatprep.subr.bf16.mxu0 0
  %1834 = vmatpush1.bf16.msra.mxu0 0
  %1835 = vmatprep.subr.bf16.mxu0 0
  %1836 = vmatpush1.bf16.msra.mxu0 0
  %1837 = vmatprep.subr.bf16.mxu0 0
  %1838 = vmatpush1.bf16.msra.mxu0 0
  %1839 = vmatprep.subr.bf16.mxu0 0
  %1840 = vmatpush1.bf16.msra.mxu0 0
  %1841 = vmatprep.subr.bf16.mxu0 0
  %1842 = vmatpush1.bf16.msra.mxu0 0
  %1843 = vmatprep.subr.bf16.mxu0 0
  %1844 = vmatpush1.bf16.msra.mxu0 0
  %1845 = vmatprep.subr.bf16.mxu0 0
  %1846 = vmatpush1.bf16.msra.mxu0 0
  %1847 = vmatprep.subr.bf16.mxu0 0
  %1848 = vmatpush1.bf16.msra.mxu0 0
  %1849 = vmatprep.subr.bf16.mxu0 0
  %1850 = vmatpush1.bf16.msra.mxu0 0
  %1851 = vmatprep.subr.bf16.mxu0 0
  %1852 = vmatpush1.bf16.msra.mxu0 0
  %1853 = vmatprep.subr.bf16.mxu0 0
  %1854 = vmatpush1.bf16.msra.mxu0 0
  %1855 = vmatprep.mubr.bf16.mxu0 0
  %1856 = vmatmul.mubr.bf16.gmra.mrb[0].mxu0 %v1821
  %v1857 = vpop.f32.mrb[0].mxu0
  %v1858 = vadd.f32 %v1775, %v1857
  %v1859 = vpop.f32.mrb[0].mxu0
  %v1860 = vpop.f32.mrb[0].mxu0
  %v1861 = vpop.f32.mrb[0].mxu0
  %1862 = vdwg.mxu0
  %v1863 = vadd.f32 %v263, %v1858
  %v1864 = vsel %vm257, %v1863, 0.0
  %1865 = vadd.xlane.f32.xlu0 %v1864
  %v1866 = vpop.xlane.xlu0 %1865
  %v1867 = vrcp.pop 32.0
  %v1868 = vmul.f32 %v1866, %v1867
  %v1869 = vsub.f32 %v1863, %v1868
  %v1870 = vmul.f32 %v1869, %v1869
  %v1871 = vsel %vm257, %v1870, 0.0
  %1872 = vadd.xlane.f32.xlu0 %v1871
  %v1873 = vpop.xlane.xlu0 %1872
  %v1874 = vmul.f32 %v1873, %v1867
  %v1875 = vadd.f32 %v1874, 1e-05
  %v1876 = vrsqrt.pop %v1875
  %v1877 = vmul.f32 %v1869, %v1876
  %v1879 = vlaneseq
  %v1880 = vshrl.u32 %v1879, 7
  %v1881 = vsub.s32 0, %v1880
  %v1882 = vrot.slane %v733, %v1881
  %v1884 = vmul.f32 %v1877, %v1882
  %v1886 = vlaneseq
  %v1887 = vshrl.u32 %v1886, 7
  %v1888 = vsub.s32 0, %v1887
  %v1889 = vrot.slane %v734, %v1888
  %v1891 = vadd.f32 %v1884, %v1889
  %v1892 = vpack.c.bf16 %v1891, %v1891
  %v1894 = vlaneseq
  %v1895 = vshrl.u32 %v1894, 7
  %v1896 = vsub.s32 0, %v1895
  %v1897 = vrot.slane %v739, %v1896
  %v1903 = vunpack.c.l.b16 %v735
  %v1904 = vunpack.c.l.b16 %v736
  %v1905 = vunpack.c.l.b16 %v737
  %v1906 = vunpack.c.l.b16 %v738
  %v1907 = vpack.c.b16 %v1904, %v1903
  %v1908 = vpack.c.b16 %v1906, %v1905
  %v1912 = vsel %vm257, %v1892, 0
  %1914 = vmatprep.subr.bf16.mxu0 0
  %1915 = vmatpush1.bf16.msra.mxu0 %v1907
  %1916 = vmatprep.subr.bf16.mxu0 0
  %1917 = vmatpush1.bf16.msra.mxu0 %v1908
  %1918 = vmatprep.subr.bf16.mxu0 0
  %1919 = vmatpush1.bf16.msra.mxu0 0
  %1920 = vmatprep.subr.bf16.mxu0 0
  %1921 = vmatpush1.bf16.msra.mxu0 0
  %1922 = vmatprep.subr.bf16.mxu0 0
  %1923 = vmatpush1.bf16.msra.mxu0 0
  %1924 = vmatprep.subr.bf16.mxu0 0
  %1925 = vmatpush1.bf16.msra.mxu0 0
  %1926 = vmatprep.subr.bf16.mxu0 0
  %1927 = vmatpush1.bf16.msra.mxu0 0
  %1928 = vmatprep.subr.bf16.mxu0 0
  %1929 = vmatpush1.bf16.msra.mxu0 0
  %1930 = vmatprep.subr.bf16.mxu0 0
  %1931 = vmatpush1.bf16.msra.mxu0 0
  %1932 = vmatprep.subr.bf16.mxu0 0
  %1933 = vmatpush1.bf16.msra.mxu0 0
  %1934 = vmatprep.subr.bf16.mxu0 0
  %1935 = vmatpush1.bf16.msra.mxu0 0
  %1936 = vmatprep.subr.bf16.mxu0 0
  %1937 = vmatpush1.bf16.msra.mxu0 0
  %1938 = vmatprep.subr.bf16.mxu0 0
  %1939 = vmatpush1.bf16.msra.mxu0 0
  %1940 = vmatprep.subr.bf16.mxu0 0
  %1941 = vmatpush1.bf16.msra.mxu0 0
  %1942 = vmatprep.subr.bf16.mxu0 0
  %1943 = vmatpush1.bf16.msra.mxu0 0
  %1944 = vmatprep.subr.bf16.mxu0 0
  %1945 = vmatpush1.bf16.msra.mxu0 0
  %1946 = vmatprep.mubr.bf16.mxu0 0
  %1947 = vmatmul.mubr.bf16.gmra.mrb[0].mxu0 %v1912
  %v1948 = vpop.f32.mrb[0].mxu0
  %v1949 = vadd.f32 %v1897, %v1948
  %v1950 = vpop.f32.mrb[0].mxu0
  %v1951 = vpop.f32.mrb[0].mxu0
  %v1952 = vpop.f32.mrb[0].mxu0
  %1953 = vdwg.mxu0
  %v1954 = vmax.f32 %v1949, 0.0
  %v1955 = vpack.c.bf16 %v1954, %v1954
  %v1957 = vlaneseq
  %v1958 = vshrl.u32 %v1957, 7
  %v1959 = vsub.s32 0, %v1958
  %v1960 = vrot.slane %v748, %v1959
  %v1970 = vunpack.c.l.b16 %v740
  %v1971 = vunpack.c.l.b16 %v741
  %v1972 = vunpack.c.l.b16 %v742
  %v1973 = vunpack.c.l.b16 %v743
  %v1974 = vunpack.c.l.b16 %v744
  %v1975 = vunpack.c.l.b16 %v745
  %v1976 = vunpack.c.l.b16 %v746
  %v1977 = vunpack.c.l.b16 %v747
  %v1978 = vpack.c.b16 %v1971, %v1970
  %v1979 = vpack.c.b16 %v1973, %v1972
  %v1980 = vpack.c.b16 %v1975, %v1974
  %v1981 = vpack.c.b16 %v1977, %v1976
  %v1987 = vsel %vm182, %v1955, 0
  %1989 = vmatprep.subr.bf16.mxu0 0
  %1990 = vmatpush1.bf16.msra.mxu0 %v1978
  %1991 = vmatprep.subr.bf16.mxu0 0
  %1992 = vmatpush1.bf16.msra.mxu0 %v1979
  %1993 = vmatprep.subr.bf16.mxu0 0
  %1994 = vmatpush1.bf16.msra.mxu0 %v1980
  %1995 = vmatprep.subr.bf16.mxu0 0
  %1996 = vmatpush1.bf16.msra.mxu0 %v1981
  %1997 = vmatprep.subr.bf16.mxu0 0
  %1998 = vmatpush1.bf16.msra.mxu0 0
  %1999 = vmatprep.subr.bf16.mxu0 0
  %2000 = vmatpush1.bf16.msra.mxu0 0
  %2001 = vmatprep.subr.bf16.mxu0 0
  %2002 = vmatpush1.bf16.msra.mxu0 0
  %2003 = vmatprep.subr.bf16.mxu0 0
  %2004 = vmatpush1.bf16.msra.mxu0 0
  %2005 = vmatprep.subr.bf16.mxu0 0
  %2006 = vmatpush1.bf16.msra.mxu0 0
  %2007 = vmatprep.subr.bf16.mxu0 0
  %2008 = vmatpush1.bf16.msra.mxu0 0
  %2009 = vmatprep.subr.bf16.mxu0 0
  %2010 = vmatpush1.bf16.msra.mxu0 0
  %2011 = vmatprep.subr.bf16.mxu0 0
  %2012 = vmatpush1.bf16.msra.mxu0 0
  %2013 = vmatprep.subr.bf16.mxu0 0
  %2014 = vmatpush1.bf16.msra.mxu0 0
  %2015 = vmatprep.subr.bf16.mxu0 0
  %2016 = vmatpush1.bf16.msra.mxu0 0
  %2017 = vmatprep.subr.bf16.mxu0 0
  %2018 = vmatpush1.bf16.msra.mxu0 0
  %2019 = vmatprep.subr.bf16.mxu0 0
  %2020 = vmatpush1.bf16.msra.mxu0 0
  %2021 = vmatprep.mubr.bf16.mxu0 0
  %2022 = vmatmul.mubr.bf16.gmra.mrb[0].mxu0 %v1987
  %v2023 = vpop.f32.mrb[0].mxu0
  %v2024 = vadd.f32 %v1960, %v2023
  %v2025 = vpop.f32.mrb[0].mxu0
  %v2026 = vpop.f32.mrb[0].mxu0
  %v2027 = vpop.f32.mrb[0].mxu0
  %2028 = vdwg.mxu0
  %v2029 = vadd.f32 %v1891, %v2024
  %v2030 = vsel %vm257, %v2029, 0.0
  %2031 = vadd.xlane.f32.xlu0 %v2030
  %v2032 = vpop.xlane.xlu0 %2031
  %v2033 = vmul.f32 %v2032, %v1867
  %v2034 = vsub.f32 %v2029, %v2033
  %v2035 = vmul.f32 %v2034, %v2034
  %v2036 = vsel %vm257, %v2035, 0.0
  %2037 = vadd.xlane.f32.xlu0 %v2036
  %v2038 = vpop.xlane.xlu0 %2037
  %v2039 = vmul.f32 %v2038, %v1867
  %v2040 = vadd.f32 %v2039, 1e-05
  %v2041 = vrsqrt.pop %v2040
  %v2042 = vmul.f32 %v2034, %v2041
  %v2044 = vlaneseq
  %v2045 = vshrl.u32 %v2044, 7
  %v2046 = vsub.s32 0, %v2045
  %v2047 = vrot.slane %v749, %v2046
  %v2049 = vmul.f32 %v2042, %v2047
  %v2051 = vlaneseq
  %v2052 = vshrl.u32 %v2051, 7
  %v2053 = vsub.s32 0, %v2052
  %v2054 = vrot.slane %v750, %v2053
  %v2056 = vadd.f32 %v2049, %v2054
  %v2057 = vld [vmem:[%s23] sm:$0xf]
  %v2058 = vld [vmem:[%s23 + $0x4] sm:$0xf]
  %v2059 = vld [vmem:[%s23 + $0x8] sm:$0xf]
  %v2060 = vld [vmem:[%s23 + $0xc] sm:$0xf]
  %v2061 = vpack.c.bf16 %v2056, %v2056
  %v2062 = vld [vmem:[#allocation2] sm:$0x1]
  %v2064 = vlaneseq
  %v2065 = vshrl.u32 %v2064, 7
  %v2066 = vsub.s32 0, %v2065
  %v2067 = vrot.slane %v2062, %v2066
  %v2073 = vunpack.c.l.b16 %v2057
  %v2074 = vunpack.c.l.b16 %v2058
  %v2075 = vunpack.c.l.b16 %v2059
  %v2076 = vunpack.c.l.b16 %v2060
  %v2077 = vpack.c.b16 %v2074, %v2073
  %v2078 = vpack.c.b16 %v2076, %v2075
  %v2082 = vsel %vm257, %v2061, 0
  %2084 = vmatprep.subr.bf16.mxu0 0
  %2085 = vmatpush1.bf16.msra.mxu0 %v2077
  %2086 = vmatprep.subr.bf16.mxu0 0
  %2087 = vmatpush1.bf16.msra.mxu0 %v2078
  %2088 = vmatprep.subr.bf16.mxu0 0
  %2089 = vmatpush1.bf16.msra.mxu0 0
  %2090 = vmatprep.subr.bf16.mxu0 0
  %2091 = vmatpush1.bf16.msra.mxu0 0
  %2092 = vmatprep.subr.bf16.mxu0 0
  %2093 = vmatpush1.bf16.msra.mxu0 0
  %2094 = vmatprep.subr.bf16.mxu0 0
  %2095 = vmatpush1.bf16.msra.mxu0 0
  %2096 = vmatprep.subr.bf16.mxu0 0
  %2097 = vmatpush1.bf16.msra.mxu0 0
  %2098 = vmatprep.subr.bf16.mxu0 0
  %2099 = vmatpush1.bf16.msra.mxu0 0
  %2100 = vmatprep.subr.bf16.mxu0 0
  %2101 = vmatpush1.bf16.msra.mxu0 0
  %2102 = vmatprep.subr.bf16.mxu0 0
  %2103 = vmatpush1.bf16.msra.mxu0 0
  %2104 = vmatprep.subr.bf16.mxu0 0
  %2105 = vmatpush1.bf16.msra.mxu0 0
  %2106 = vmatprep.subr.bf16.mxu0 0
  %2107 = vmatpush1.bf16.msra.mxu0 0
  %2108 = vmatprep.subr.bf16.mxu0 0
  %2109 = vmatpush1.bf16.msra.mxu0 0
  %2110 = vmatprep.subr.bf16.mxu0 0
  %2111 = vmatpush1.bf16.msra.mxu0 0
  %2112 = vmatprep.subr.bf16.mxu0 0
  %2113 = vmatpush1.bf16.msra.mxu0 0
  %2114 = vmatprep.subr.bf16.mxu0 0
  %2115 = vmatpush1.bf16.msra.mxu0 0
  %2116 = vmatprep.mubr.bf16.mxu0 0
  %2117 = vmatmul.mubr.bf16.gmra.mrb[0].mxu0 %v2082
  %v2118 = vpop.f32.mrb[0].mxu0
  %v2119 = vadd.f32 %v2067, %v2118
  %v2120 = vpop.f32.mrb[0].mxu0
  %v2121 = vpop.f32.mrb[0].mxu0
  %v2122 = vpop.f32.mrb[0].mxu0
  %2123 = vdwg.mxu0
  %vm2124 = vcmask 7168
  %2125 = vst.msk [vmem:[%s25] sm:$0xff] %vm2124, %v2119
  // Predicated region
  $region102: #{model_forward.1} parent=0 // pred_check
    _
  $region103: #{model_forward.1} parent=0 // pred_check_branch
    %2127 = sbr.rel (0) target = $region105
  $region104: #{model_forward.1} parent=0 // pred_region
    _
  $region105: #{model_forward.1} parent=0 // pred_fallthru
    _
  // Predicated region
  $region106: #{model_forward.1} parent=0 // pred_check
    _
  $region107: #{model_forward.1} parent=0 // pred_check_branch
    %2129 = sbr.rel (0) target = $region109
  $region108: #{model_forward.1} parent=0 // pred_region
    _
  $region109: #{model_forward.1} parent=0 // pred_fallthru
    _

</llo_original>
